<compile_context>
chip_gen: v6e
topology: v6e:2x2x1
jax: 0.10.0
libtpu: 0.0.40
codegen_flags: <defaults>
</compile_context>

<pallas_src>
import math
import functools

import jax
import jax.numpy as jnp
from jax import lax
from jax.experimental import pallas as pl
from jax.experimental.pallas import tpu as pltpu


def _qkv_proj_kernel(xq_ref, xk_ref, xv_ref, wq_ref, wk_ref, wv_ref,
                     q_out, k_out, v_out):
    """Full-width (tile, D) @ (D, D) projections; 1/sqrt(d_k) already in Wq."""
    def mm(a, b):
        return jnp.dot(a, b, preferred_element_type=jnp.float32)

    q_out[0] = mm(xq_ref[0], wq_ref[...]).astype(q_out.dtype)
    k_out[0] = mm(xk_ref[0], wk_ref[...]).astype(k_out.dtype)
    v_out[0] = mm(xv_ref[0], wv_ref[...]).astype(v_out.dtype)


def _attn_kernel(q_ref, k_ref, v_ref, mask_ref, wfc_ref, out_ref, ctx_ref, *,
                 n_heads, d_k, compute_dtype):
    q_all = q_ref[0]            # (TQ, D), compute_dtype, already scaled
    k_all = k_ref[0]            # (S , D), compute_dtype
    v_all = v_ref[0]            # (S , D), compute_dtype

    # Additive mask bias computed once per query tile (hoisted out of the head
    # loop); int8 mask compared directly (no upcast).
    bias = jnp.where(mask_ref[0] == 0, jnp.float32(-1e9), jnp.float32(0.0))

    for h in range(n_heads):
        lo = h * d_k
        q_h = q_all[:, lo:lo + d_k]                       # (TQ, d_k)
        k_h = k_all[:, lo:lo + d_k]                       # (S , d_k)
        v_h = v_all[:, lo:lo + d_k]                       # (S , d_k)

        # scores = q_h @ k_h^T via dot_general contracting d_k directly
        # (no materialized transpose).  Softmax math stays in f32.
        scores = lax.dot_general(
            q_h, k_h, dimension_numbers=(((1,), (1,)), ((), ())),
            preferred_element_type=jnp.float32) + bias    # (TQ, S)

        m = jnp.max(scores, axis=-1, keepdims=True)
        e = jnp.exp(scores - m)
        denom = jnp.sum(e, axis=-1, keepdims=True)

        # Deferred normalization: (e @ v) * 1/denom — a (TQ, d_k) VPU multiply
        # instead of a (TQ, S) one; reciprocal goes to the EUP slot.
        ctx = jnp.dot(e.astype(compute_dtype), v_h,
                      preferred_element_type=jnp.float32) # (TQ, d_k) f32
        ctx = ctx * pl.reciprocal(denom, approx=True)
        ctx_ref[:, lo:lo + d_k] = ctx.astype(ctx_ref.dtype)

    # Single (TQ, D) @ (D, D) output projection (one bulk cast of the
    # concatenated contexts to the MXU operand dtype).
    out_ref[0] = jnp.dot(ctx_ref[...].astype(compute_dtype), wfc_ref[...],
                         preferred_element_type=jnp.float32
                         ).astype(out_ref.dtype)


def _pick_seq_tile(S):
    """Largest aligned sequence tile for the per-generation VMEM budget."""
    try:
        vmem = pltpu.get_tpu_info().vmem_capacity_bytes
    except Exception:            # info query unavailable -> be conservative
        vmem = 64 << 20
    cap = 512 if vmem > (64 << 20) else 256   # smaller tiles on 64 MiB (v7x)
    if S <= cap:
        return S
    t = cap
    while t >= 8:
        if S % t == 0:
            return t
        t -= 8
    return S                      # no aligned divisor: single full-S tile


def _vmem_limit_bytes(footprint):
    # Explicit scoped-VMEM budget: 2x headroom over the static block
    # footprint, clamped to a range valid on v5e/v6e (128 MiB physical) and
    # v7x (64 MiB physical).
    return int(min(max(2 * footprint, 32 << 20), 56 << 20))


def multi_headed_attention(query, key, value, mask, wq, wk, wv, wfc, *,
                           n_heads, q_tile=None, compute_dtype=jnp.bfloat16):
    """query/key/value: (B, S, D); mask: (B, S, S); w*: (D, D) with y = x @ w.

    compute_dtype is the MXU operand dtype (bf16 default — native on
    v5e/v6e/v7x); accumulation and softmax math are always f32.
    Dropout is inference-mode (identity).
    """
    B, S, D = query.shape
    assert D % n_heads == 0
    d_k = D // n_heads

    if q_tile is None:
        q_tile = _pick_seq_tile(S)
    assert S % q_tile == 0
    n_q_tiles = S // q_tile

    # Cast activations/weights to the MXU operand dtype once, in the wrapper
    # (halves HBM traffic and the VMEM buffers Pallas allocates for them).
    # 1/sqrt(d_k) is folded into Wq (scaled in f32, then cast).
    wq_s = (wq.astype(jnp.float32) * (1.0 / math.sqrt(d_k))).astype(compute_dtype)
    wk_c = wk.astype(compute_dtype)
    wv_c = wv.astype(compute_dtype)
    wfc_c = wfc.astype(compute_dtype)
    q_in = query.astype(compute_dtype)
    k_in = key.astype(compute_dtype)
    v_in = value.astype(compute_dtype)

    # int8 mask: 4x less HBM traffic than int32 (only ==0 / !=0 matters).
    mask_i8 = (mask != 0).astype(jnp.int8)

    c_bytes = jnp.dtype(compute_dtype).itemsize

    def run(single_buffer_weights):
        def weight_spec(index_map):
            # Grid-invariant weights: single-buffer them when supported.
            if single_buffer_weights:
                return pl.BlockSpec((D, D), index_map,
                                    pipeline_mode=pl.Buffered(1))
            return pl.BlockSpec((D, D), index_map)

        n_wbuf = 1 if single_buffer_weights else 2

        # ---------- 1) Q/K/V projections: one pass over the sequence --------
        x_spec = pl.BlockSpec((1, q_tile, D), lambda b, si: (b, si, 0))
        w_spec = weight_spec(lambda b, si: (0, 0))
        proj_foot = (3 * 2 * q_tile * D * c_bytes          # x blocks (2-buf)
                     + 3 * n_wbuf * D * D * c_bytes        # weights
                     + 3 * 2 * q_tile * D * c_bytes)       # outputs (2-buf)

        q_p, k_p, v_p = pl.pallas_call(
            _qkv_proj_kernel,
            out_shape=tuple(jax.ShapeDtypeStruct((B, S, D), compute_dtype)
                            for _ in range(3)),
            grid_spec=pltpu.PrefetchScalarGridSpec(
                num_scalar_prefetch=0,
                grid=(B, n_q_tiles),
                in_specs=[x_spec, x_spec, x_spec, w_spec, w_spec, w_spec],
                out_specs=[x_spec, x_spec, x_spec]),
            compiler_params=pltpu.CompilerParams(
                dimension_semantics=("parallel", "parallel"),
                vmem_limit_bytes=_vmem_limit_bytes(proj_foot)),
        )(q_in, k_in, v_in, wq_s, wk_c, wv_c)

        # ---------- 2) Attention + output projection per (batch, q-tile) ----
        q_spec = pl.BlockSpec((1, q_tile, D), lambda b, qi: (b, qi, 0))
        kv_spec = pl.BlockSpec((1, S, D), lambda b, qi: (b, 0, 0))
        mask_spec = pl.BlockSpec((1, q_tile, S), lambda b, qi: (b, qi, 0))
        wfc_spec = weight_spec(lambda b, qi: (0, 0))
        out_spec = pl.BlockSpec((1, q_tile, D), lambda b, qi: (b, qi, 0))

        attn_foot = (2 * q_tile * D * c_bytes              # q blocks
                     + 2 * 2 * S * D * c_bytes             # k/v blocks
                     + 2 * q_tile * S                      # int8 mask blocks
                     + n_wbuf * D * D * c_bytes            # wfc
                     + 2 * q_tile * D * 4                  # f32 out blocks
                     + q_tile * D * 4                      # ctx scratch
                     + 4 * q_tile * S * 4)                 # score/exp temps

        kernel = functools.partial(_attn_kernel, n_heads=n_heads, d_k=d_k,
                                   compute_dtype=compute_dtype)
        return pl.pallas_call(
            kernel,
            out_shape=jax.ShapeDtypeStruct((B, S, D), jnp.float32),
            grid_spec=pltpu.PrefetchScalarGridSpec(
                num_scalar_prefetch=0,
                grid=(B, n_q_tiles),
                in_specs=[q_spec, kv_spec, kv_spec, mask_spec, wfc_spec],
                out_specs=out_spec,
                scratch_shapes=[pltpu.VMEM((q_tile, D), jnp.float32)]),
            compiler_params=pltpu.CompilerParams(
                dimension_semantics=("parallel", "parallel"),
                vmem_limit_bytes=_vmem_limit_bytes(attn_foot)),
        )(q_p, k_p, v_p, mask_i8, wfc_c)

    try:
        return run(single_buffer_weights=True)
    except Exception:
        # pl.Buffered(1) (single-buffered grid-invariant weights) unsupported
        # by this jax/Mosaic version — retry with default double buffering.
        # Any unrelated error will re-raise from the fallback path.
        return run(single_buffer_weights=False)


def _reference(query, key, value, mask, wq, wk, wv, wfc, *, n_heads):
    """Plain-JAX reference mirroring the PyTorch module (eval mode)."""
    B, S, D = query.shape
    d_k = D // n_heads

    def split_heads(x):
        return x.reshape(B, S, n_heads, d_k).transpose(0, 2, 1, 3)  # (B,H,S,dk)

    q = split_heads(query @ wq)
    k = split_heads(key @ wk)
    v = split_heads(value @ wv)

    scores = jnp.einsum("bhqd,bhkd->bhqk", q, k) / math.sqrt(d_k)
    scores = jnp.where(mask[:, None, :, :] == 0, -1000000000.0, scores)
    p = jax.nn.softmax(scores, axis=-1)
    ctx = jnp.einsum("bhqk,bhkd->bhqd", p, v)
    ctx = ctx.transpose(0, 2, 1, 3).reshape(B, S, D)
    return ctx @ wfc


if __name__ == "__main__":
    B, S, D, H = 2, 8, 32, 4   # batch, seq, d_model, heads (d_k = 8)

    key0 = jax.random.PRNGKey(0)
    kq, kk, kv, kwq, kwk, kwv, kwf = jax.random.split(key0, 7)

    query = jax.random.normal(kq, (B, S, D), dtype=jnp.float32)
    key_in = jax.random.normal(kk, (B, S, D), dtype=jnp.float32)
    value = jax.random.normal(kv, (B, S, D), dtype=jnp.float32)

    # Causal mask shared across heads (mask==0 positions are blocked).
    mask = jnp.tril(jnp.ones((S, S), dtype=jnp.int32))
    mask = jnp.broadcast_to(mask, (B, S, S))

    # Deterministic "Linear(d_model, d_model, bias=False)" weights, stored
    # pre-transposed so y = x @ W (== x @ torch_weight.T).
    scale = 1.0 / math.sqrt(D)
    wq = jax.random.uniform(kwq, (D, D), jnp.float32, -scale, scale)
    wk = jax.random.uniform(kwk, (D, D), jnp.float32, -scale, scale)
    wv = jax.random.uniform(kwv, (D, D), jnp.float32, -scale, scale)
    wfc = jax.random.uniform(kwf, (D, D), jnp.float32, -scale, scale)

    ref = _reference(query, key_in, value, mask, wq, wk, wv, wfc, n_heads=H)

    # Default path: bf16 MXU operands (f32 accumulate, f32 softmax math).
    out_bf16 = multi_headed_attention(query, key_in, value, mask,
                                      wq, wk, wv, wfc, n_heads=H)
    out_bf16 = jax.block_until_ready(out_bf16)
    assert out_bf16.shape == (B, S, D)
    assert jnp.allclose(out_bf16, ref, atol=5e-2, rtol=5e-2), \
        "bf16 kernel mismatch vs reference"

    # Strict-parity path: f32 operands end to end (tolerance covers the
    # approximate EUP reciprocal in the softmax).
    out_f32 = multi_headed_attention(query, key_in, value, mask,
                                     wq, wk, wv, wfc, n_heads=H,
                                     compute_dtype=jnp.float32)
    out_f32 = jax.block_until_ready(out_f32)
    assert jnp.allclose(out_f32, ref, atol=2e-3, rtol=2e-3), \
        "f32 kernel mismatch vs reference"

    print("KERNEL_OK")
</pallas_src>

<mosaic_0001>
module attributes {stable_mosaic.version = 11 : i64} {
  func.func @_qkv_proj_kernel(%arg0: i32, %arg1: i32, %arg2: memref<1x8x32xbf16, #tpu.memory_space<vmem>>, %arg3: memref<1x8x32xbf16, #tpu.memory_space<vmem>>, %arg4: memref<1x8x32xbf16, #tpu.memory_space<vmem>>, %arg5: memref<32x32xbf16, #tpu.memory_space<vmem>>, %arg6: memref<32x32xbf16, #tpu.memory_space<vmem>>, %arg7: memref<32x32xbf16, #tpu.memory_space<vmem>>, %arg8: memref<1x8x32xbf16, #tpu.memory_space<vmem>>, %arg9: memref<1x8x32xbf16, #tpu.memory_space<vmem>>, %arg10: memref<1x8x32xbf16, #tpu.memory_space<vmem>>) attributes {dimension_semantics = [#tpu.dimension_semantics<parallel>, #tpu.dimension_semantics<parallel>], iteration_bounds = array<i64: 2, 1>, scalar_prefetch = 0 : i64, scratch_operands = 0 : i64, tpu.core_type = #tpu.core_type<tc>, window_params = [{transform_indices = @transform_0, window_bounds = array<i64: 1, 8, 32>}, {transform_indices = @transform_1, window_bounds = array<i64: 1, 8, 32>}, {transform_indices = @transform_2, window_bounds = array<i64: 1, 8, 32>}, {pipeline_mode = #tpu.pipeline_mode<synchronous>, transform_indices = @transform_3, window_bounds = array<i64: 32, 32>}, {pipeline_mode = #tpu.pipeline_mode<synchronous>, transform_indices = @transform_4, window_bounds = array<i64: 32, 32>}, {pipeline_mode = #tpu.pipeline_mode<synchronous>, transform_indices = @transform_5, window_bounds = array<i64: 32, 32>}, {transform_indices = @transform_6, window_bounds = array<i64: 1, 8, 32>}, {transform_indices = @transform_7, window_bounds = array<i64: 1, 8, 32>}, {transform_indices = @transform_8, window_bounds = array<i64: 1, 8, 32>}]} {
    %c0 = arith.constant 0 : index
    %c0_0 = arith.constant 0 : index
    %c0_1 = arith.constant 0 : index
    %0 = vector.load %arg2[%c0, %c0_0, %c0_1] : memref<1x8x32xbf16, #tpu.memory_space<vmem>>, vector<1x8x32xbf16>
    %1 = vector.shape_cast %0 : vector<1x8x32xbf16> to vector<8x32xbf16>
    %c0_2 = arith.constant 0 : index
    %c0_3 = arith.constant 0 : index
    %2 = vector.load %arg5[%c0_2, %c0_3] : memref<32x32xbf16, #tpu.memory_space<vmem>>, vector<32x32xbf16>
    %cst = arith.constant dense<0.000000e+00> : vector<8x32xf32>
    %3 = tpu.matmul %1, %2, %cst {dimension_numbers = #tpu.dot_dimension_numbers<[1], [0], [0], [1], [0, 0, 1, 1], [], []>} : vector<8x32xbf16>, vector<32x32xbf16>, vector<8x32xf32> -> vector<8x32xf32>
    %4 = arith.truncf %3 : vector<8x32xf32> to vector<8x32xbf16>
    %c0_4 = arith.constant 0 : index
    %c0_5 = arith.constant 0 : index
    %c0_6 = arith.constant 0 : index
    %5 = vector.load %arg8[%c0_4, %c0_5, %c0_6] : memref<1x8x32xbf16, #tpu.memory_space<vmem>>, vector<1x8x32xbf16>
    %6 = vector.shape_cast %5 : vector<1x8x32xbf16> to vector<8x32xbf16>
    %7 = vector.shape_cast %4 : vector<8x32xbf16> to vector<1x8x32xbf16>
    tpu.vector_store %arg8[%c0_4, %c0_5, %c0_6], %7 {strides = array<i32>} : memref<1x8x32xbf16, #tpu.memory_space<vmem>>, vector<1x8x32xbf16>,
    %c0_7 = arith.constant 0 : index
    %c0_8 = arith.constant 0 : index
    %c0_9 = arith.constant 0 : index
    %8 = vector.load %arg3[%c0_7, %c0_8, %c0_9] : memref<1x8x32xbf16, #tpu.memory_space<vmem>>, vector<1x8x32xbf16>
    %9 = vector.shape_cast %8 : vector<1x8x32xbf16> to vector<8x32xbf16>
    %c0_10 = arith.constant 0 : index
    %c0_11 = arith.constant 0 : index
    %10 = vector.load %arg6[%c0_10, %c0_11] : memref<32x32xbf16, #tpu.memory_space<vmem>>, vector<32x32xbf16>
    %cst_12 = arith.constant dense<0.000000e+00> : vector<8x32xf32>
    %11 = tpu.matmul %9, %10, %cst_12 {dimension_numbers = #tpu.dot_dimension_numbers<[1], [0], [0], [1], [0, 0, 1, 1], [], []>} : vector<8x32xbf16>, vector<32x32xbf16>, vector<8x32xf32> -> vector<8x32xf32>
    %12 = arith.truncf %11 : vector<8x32xf32> to vector<8x32xbf16>
    %c0_13 = arith.constant 0 : index
    %c0_14 = arith.constant 0 : index
    %c0_15 = arith.constant 0 : index
    %13 = vector.load %arg9[%c0_13, %c0_14, %c0_15] : memref<1x8x32xbf16, #tpu.memory_space<vmem>>, vector<1x8x32xbf16>
    %14 = vector.shape_cast %13 : vector<1x8x32xbf16> to vector<8x32xbf16>
    %15 = vector.shape_cast %12 : vector<8x32xbf16> to vector<1x8x32xbf16>
    tpu.vector_store %arg9[%c0_13, %c0_14, %c0_15], %15 {strides = array<i32>} : memref<1x8x32xbf16, #tpu.memory_space<vmem>>, vector<1x8x32xbf16>,
    %c0_16 = arith.constant 0 : index
    %c0_17 = arith.constant 0 : index
    %c0_18 = arith.constant 0 : index
    %16 = vector.load %arg4[%c0_16, %c0_17, %c0_18] : memref<1x8x32xbf16, #tpu.memory_space<vmem>>, vector<1x8x32xbf16>
    %17 = vector.shape_cast %16 : vector<1x8x32xbf16> to vector<8x32xbf16>
    %c0_19 = arith.constant 0 : index
    %c0_20 = arith.constant 0 : index
    %18 = vector.load %arg7[%c0_19, %c0_20] : memref<32x32xbf16, #tpu.memory_space<vmem>>, vector<32x32xbf16>
    %cst_21 = arith.constant dense<0.000000e+00> : vector<8x32xf32>
    %19 = tpu.matmul %17, %18, %cst_21 {dimension_numbers = #tpu.dot_dimension_numbers<[1], [0], [0], [1], [0, 0, 1, 1], [], []>} : vector<8x32xbf16>, vector<32x32xbf16>, vector<8x32xf32> -> vector<8x32xf32>
    %20 = arith.truncf %19 : vector<8x32xf32> to vector<8x32xbf16>
    %c0_22 = arith.constant 0 : index
    %c0_23 = arith.constant 0 : index
    %c0_24 = arith.constant 0 : index
    %21 = vector.load %arg10[%c0_22, %c0_23, %c0_24] : memref<1x8x32xbf16, #tpu.memory_space<vmem>>, vector<1x8x32xbf16>
    %22 = vector.shape_cast %21 : vector<1x8x32xbf16> to vector<8x32xbf16>
    %23 = vector.shape_cast %20 : vector<8x32xbf16> to vector<1x8x32xbf16>
    tpu.vector_store %arg10[%c0_22, %c0_23, %c0_24], %23 {strides = array<i32>} : memref<1x8x32xbf16, #tpu.memory_space<vmem>>, vector<1x8x32xbf16>,
    return
  }
  func.func @transform_0(%arg0: i32, %arg1: i32) -> (i32, i32, i32) {
    %c0_i32 = arith.constant 0 : i32
    %c0_i32_0 = arith.constant 0 : i32
    return %arg0, %arg1, %c0_i32 : i32, i32, i32
  }
  func.func @transform_1(%arg0: i32, %arg1: i32) -> (i32, i32, i32) {
    %c0_i32 = arith.constant 0 : i32
    %c0_i32_0 = arith.constant 0 : i32
    return %arg0, %arg1, %c0_i32 : i32, i32, i32
  }
  func.func @transform_2(%arg0: i32, %arg1: i32) -> (i32, i32, i32) {
    %c0_i32 = arith.constant 0 : i32
    %c0_i32_0 = arith.constant 0 : i32
    return %arg0, %arg1, %c0_i32 : i32, i32, i32
  }
  func.func @transform_3(%arg0: i32, %arg1: i32) -> (i32, i32) {
    %c0_i32 = arith.constant 0 : i32
    %c0_i32_0 = arith.constant 0 : i32
    %c0_i32_1 = arith.constant 0 : i32
    return %c0_i32, %c0_i32_0 : i32, i32
  }
  func.func @transform_4(%arg0: i32, %arg1: i32) -> (i32, i32) {
    %c0_i32 = arith.constant 0 : i32
    %c0_i32_0 = arith.constant 0 : i32
    %c0_i32_1 = arith.constant 0 : i32
    return %c0_i32, %c0_i32_0 : i32, i32
  }
  func.func @transform_5(%arg0: i32, %arg1: i32) -> (i32, i32) {
    %c0_i32 = arith.constant 0 : i32
    %c0_i32_0 = arith.constant 0 : i32
    %c0_i32_1 = arith.constant 0 : i32
    return %c0_i32, %c0_i32_0 : i32, i32
  }
  func.func @transform_6(%arg0: i32, %arg1: i32) -> (i32, i32, i32) {
    %c0_i32 = arith.constant 0 : i32
    %c0_i32_0 = arith.constant 0 : i32
    return %arg0, %arg1, %c0_i32 : i32, i32, i32
  }
  func.func @transform_7(%arg0: i32, %arg1: i32) -> (i32, i32, i32) {
    %c0_i32 = arith.constant 0 : i32
    %c0_i32_0 = arith.constant 0 : i32
    return %arg0, %arg1, %c0_i32 : i32, i32, i32
  }
  func.func @transform_8(%arg0: i32, %arg1: i32) -> (i32, i32, i32) {
    %c0_i32 = arith.constant 0 : i32
    %c0_i32_0 = arith.constant 0 : i32
    return %arg0, %arg1, %c0_i32 : i32, i32, i32
  }
}

module attributes {stable_mosaic.version = 11 : i64} {
  func.func @_qkv_proj_kernel(%arg0: i32, %arg1: i32, %arg2: memref<1x8x32xbf16, #tpu.memory_space<vmem>>, %arg3: memref<1x8x32xbf16, #tpu.memory_space<vmem>>, %arg4: memref<1x8x32xbf16, #tpu.memory_space<vmem>>, %arg5: memref<32x32xbf16, #tpu.memory_space<vmem>>, %arg6: memref<32x32xbf16, #tpu.memory_space<vmem>>, %arg7: memref<32x32xbf16, #tpu.memory_space<vmem>>, %arg8: memref<1x8x32xbf16, #tpu.memory_space<vmem>>, %arg9: memref<1x8x32xbf16, #tpu.memory_space<vmem>>, %arg10: memref<1x8x32xbf16, #tpu.memory_space<vmem>>) attributes {dimension_semantics = [#tpu.dimension_semantics<parallel>, #tpu.dimension_semantics<parallel>], iteration_bounds = array<i64: 2, 1>, scalar_prefetch = 0 : i64, scratch_operands = 0 : i64, tpu.core_type = #tpu.core_type<tc>, window_params = [{transform_indices = @transform_0, window_bounds = array<i64: 1, 8, 32>}, {transform_indices = @transform_1, window_bounds = array<i64: 1, 8, 32>}, {transform_indices = @transform_2, window_bounds = array<i64: 1, 8, 32>}, {pipeline_mode = #tpu.pipeline_mode<synchronous>, transform_indices = @transform_3, window_bounds = array<i64: 32, 32>}, {pipeline_mode = #tpu.pipeline_mode<synchronous>, transform_indices = @transform_4, window_bounds = array<i64: 32, 32>}, {pipeline_mode = #tpu.pipeline_mode<synchronous>, transform_indices = @transform_5, window_bounds = array<i64: 32, 32>}, {transform_indices = @transform_6, window_bounds = array<i64: 1, 8, 32>}, {transform_indices = @transform_7, window_bounds = array<i64: 1, 8, 32>}, {transform_indices = @transform_8, window_bounds = array<i64: 1, 8, 32>}]} {
    %c0 = arith.constant 0 : index
    %c0_0 = arith.constant 0 : index
    %c0_1 = arith.constant 0 : index
    %0 = vector.load %arg2[%c0, %c0_0, %c0_1] : memref<1x8x32xbf16, #tpu.memory_space<vmem>>, vector<1x8x32xbf16>
    %1 = vector.shape_cast %0 : vector<1x8x32xbf16> to vector<8x32xbf16>
    %c0_2 = arith.constant 0 : index
    %c0_3 = arith.constant 0 : index
    %2 = vector.load %arg5[%c0_2, %c0_3] : memref<32x32xbf16, #tpu.memory_space<vmem>>, vector<32x32xbf16>
    %cst = arith.constant dense<0.000000e+00> : vector<8x32xf32>
    %3 = tpu.matmul %1, %2, %cst {dimension_numbers = #tpu.dot_dimension_numbers<[1], [0], [0], [1], [0, 0, 1, 1], [], []>} : vector<8x32xbf16>, vector<32x32xbf16>, vector<8x32xf32> -> vector<8x32xf32>
    %4 = arith.truncf %3 : vector<8x32xf32> to vector<8x32xbf16>
    %c0_4 = arith.constant 0 : index
    %c0_5 = arith.constant 0 : index
    %c0_6 = arith.constant 0 : index
    %5 = vector.load %arg8[%c0_4, %c0_5, %c0_6] : memref<1x8x32xbf16, #tpu.memory_space<vmem>>, vector<1x8x32xbf16>
    %6 = vector.shape_cast %5 : vector<1x8x32xbf16> to vector<8x32xbf16>
    %7 = vector.shape_cast %4 : vector<8x32xbf16> to vector<1x8x32xbf16>
    tpu.vector_store %arg8[%c0_4, %c0_5, %c0_6], %7 {strides = array<i32>} : memref<1x8x32xbf16, #tpu.memory_space<vmem>>, vector<1x8x32xbf16>,
    %c0_7 = arith.constant 0 : index
    %c0_8 = arith.constant 0 : index
    %c0_9 = arith.constant 0 : index
    %8 = vector.load %arg3[%c0_7, %c0_8, %c0_9] : memref<1x8x32xbf16, #tpu.memory_space<vmem>>, vector<1x8x32xbf16>
    %9 = vector.shape_cast %8 : vector<1x8x32xbf16> to vector<8x32xbf16>
    %c0_10 = arith.constant 0 : index
    %c0_11 = arith.constant 0 : index
    %10 = vector.load %arg6[%c0_10, %c0_11] : memref<32x32xbf16, #tpu.memory_space<vmem>>, vector<32x32xbf16>
    %cst_12 = arith.constant dense<0.000000e+00> : vector<8x32xf32>
    %11 = tpu.matmul %9, %10, %cst_12 {dimension_numbers = #tpu.dot_dimension_numbers<[1], [0], [0], [1], [0, 0, 1, 1], [], []>} : vector<8x32xbf16>, vector<32x32xbf16>, vector<8x32xf32> -> vector<8x32xf32>
    %12 = arith.truncf %11 : vector<8x32xf32> to vector<8x32xbf16>
    %c0_13 = arith.constant 0 : index
    %c0_14 = arith.constant 0 : index
    %c0_15 = arith.constant 0 : index
    %13 = vector.load %arg9[%c0_13, %c0_14, %c0_15] : memref<1x8x32xbf16, #tpu.memory_space<vmem>>, vector<1x8x32xbf16>
    %14 = vector.shape_cast %13 : vector<1x8x32xbf16> to vector<8x32xbf16>
    %15 = vector.shape_cast %12 : vector<8x32xbf16> to vector<1x8x32xbf16>
    tpu.vector_store %arg9[%c0_13, %c0_14, %c0_15], %15 {strides = array<i32>} : memref<1x8x32xbf16, #tpu.memory_space<vmem>>, vector<1x8x32xbf16>,
    %c0_16 = arith.constant 0 : index
    %c0_17 = arith.constant 0 : index
    %c0_18 = arith.constant 0 : index
    %16 = vector.load %arg4[%c0_16, %c0_17, %c0_18] : memref<1x8x32xbf16, #tpu.memory_space<vmem>>, vector<1x8x32xbf16>
    %17 = vector.shape_cast %16 : vector<1x8x32xbf16> to vector<8x32xbf16>
    %c0_19 = arith.constant 0 : index
    %c0_20 = arith.constant 0 : index
    %18 = vector.load %arg7[%c0_19, %c0_20] : memref<32x32xbf16, #tpu.memory_space<vmem>>, vector<32x32xbf16>
    %cst_21 = arith.constant dense<0.000000e+00> : vector<8x32xf32>
    %19 = tpu.matmul %17, %18, %cst_21 {dimension_numbers = #tpu.dot_dimension_numbers<[1], [0], [0], [1], [0, 0, 1, 1], [], []>} : vector<8x32xbf16>, vector<32x32xbf16>, vector<8x32xf32> -> vector<8x32xf32>
    %20 = arith.truncf %19 : vector<8x32xf32> to vector<8x32xbf16>
    %c0_22 = arith.constant 0 : index
    %c0_23 = arith.constant 0 : index
    %c0_24 = arith.constant 0 : index
    %21 = vector.load %arg10[%c0_22, %c0_23, %c0_24] : memref<1x8x32xbf16, #tpu.memory_space<vmem>>, vector<1x8x32xbf16>
    %22 = vector.shape_cast %21 : vector<1x8x32xbf16> to vector<8x32xbf16>
    %23 = vector.shape_cast %20 : vector<8x32xbf16> to vector<1x8x32xbf16>
    tpu.vector_store %arg10[%c0_22, %c0_23, %c0_24], %23 {strides = array<i32>} : memref<1x8x32xbf16, #tpu.memory_space<vmem>>, vector<1x8x32xbf16>,
    return
  }
  func.func @transform_0(%arg0: i32, %arg1: i32) -> (i32, i32, i32) {
    %c0_i32 = arith.constant 0 : i32
    %c0_i32_0 = arith.constant 0 : i32
    return %arg0, %arg1, %c0_i32 : i32, i32, i32
  }
  func.func @transform_1(%arg0: i32, %arg1: i32) -> (i32, i32, i32) {
    %c0_i32 = arith.constant 0 : i32
    %c0_i32_0 = arith.constant 0 : i32
    return %arg0, %arg1, %c0_i32 : i32, i32, i32
  }
  func.func @transform_2(%arg0: i32, %arg1: i32) -> (i32, i32, i32) {
    %c0_i32 = arith.constant 0 : i32
    %c0_i32_0 = arith.constant 0 : i32
    return %arg0, %arg1, %c0_i32 : i32, i32, i32
  }
  func.func @transform_3(%arg0: i32, %arg1: i32) -> (i32, i32) {
    %c0_i32 = arith.constant 0 : i32
    %c0_i32_0 = arith.constant 0 : i32
    %c0_i32_1 = arith.constant 0 : i32
    return %c0_i32, %c0_i32_0 : i32, i32
  }
  func.func @transform_4(%arg0: i32, %arg1: i32) -> (i32, i32) {
    %c0_i32 = arith.constant 0 : i32
    %c0_i32_0 = arith.constant 0 : i32
    %c0_i32_1 = arith.constant 0 : i32
    return %c0_i32, %c0_i32_0 : i32, i32
  }
  func.func @transform_5(%arg0: i32, %arg1: i32) -> (i32, i32) {
    %c0_i32 = arith.constant 0 : i32
    %c0_i32_0 = arith.constant 0 : i32
    %c0_i32_1 = arith.constant 0 : i32
    return %c0_i32, %c0_i32_0 : i32, i32
  }
  func.func @transform_6(%arg0: i32, %arg1: i32) -> (i32, i32, i32) {
    %c0_i32 = arith.constant 0 : i32
    %c0_i32_0 = arith.constant 0 : i32
    return %arg0, %arg1, %c0_i32 : i32, i32, i32
  }
  func.func @transform_7(%arg0: i32, %arg1: i32) -> (i32, i32, i32) {
    %c0_i32 = arith.constant 0 : i32
    %c0_i32_0 = arith.constant 0 : i32
    return %arg0, %arg1, %c0_i32 : i32, i32, i32
  }
  func.func @transform_8(%arg0: i32, %arg1: i32) -> (i32, i32, i32) {
    %c0_i32 = arith.constant 0 : i32
    %c0_i32_0 = arith.constant 0 : i32
    return %arg0, %arg1, %c0_i32 : i32, i32, i32
  }
}

</mosaic_0001>

<llo_original>
// kernel: tpu_custom_call.1
$region0: #{tpu_custom_call.1}
  #allocation0 [shape = 'u32[]', space=smem, size = 0x4, offset = 0x4, fixed_abs, tag = 'smem constant byte address 0x4 - core index']
  #allocation1 [shape = 'u32[144,128]{1,0:T(1,128)}', space=vmem, size = 0x12000, scoped, tag = 'internal scratch']
  %s0 = inlined_call_operand.hbm [shape: bf16[2,8,32], index: 0, kind: input, shape index: {}]
  %s1 = inlined_call_operand.hbm [shape: bf16[2,8,32], index: 1, kind: input, shape index: {}]
  %s2 = inlined_call_operand.hbm [shape: bf16[2,8,32], index: 2, kind: input, shape index: {}]
  %s3 = inlined_call_operand.hbm [shape: bf16[32,32], index: 3, kind: input, shape index: {}]
  %s4 = inlined_call_operand.hbm [shape: bf16[32,32], index: 4, kind: input, shape index: {}]
  %s5 = inlined_call_operand.hbm [shape: bf16[32,32], index: 5, kind: input, shape index: {}]
  %s6 = inlined_call_operand.hbm [shape: bf16[2,8,32], index: 6, kind: output, shape index: {0}]
  %s7 = inlined_call_operand.hbm [shape: bf16[2,8,32], index: 7, kind: output, shape index: {1}]
  %s8 = inlined_call_operand.hbm [shape: bf16[2,8,32], index: 8, kind: output, shape index: {2}]
  %9 = xla_tuple %s6, %s7, %s8
  %s10 = sld [smem:[#allocation0]]
  $region97: #{tpu_custom_call.1} parent=0
    _
  %s12 = ssub.s32 1, %s10
  %s13 = scalar_select 0, %s12, %s10
  $region1: #{tpu_custom_call.1} parent=0
    #allocation2 [shape = 'u8[4096]{0}', space=vmem, size = 0x1000, scoped, tag = 'input window, operand 0']
    #allocation3 [shape = 's32[2]{0}', space=sflag, size = 0x8, scoped, tag = 'scoped memory for tpu_custom_call.1']
    #allocation4 [shape = 's32[2]{0}', space=sflag, size = 0x8, scoped, tag = 'scoped memory for tpu_custom_call.1']
    #allocation5 [shape = 'u8[4096]{0}', space=vmem, size = 0x1000, scoped, tag = 'input window, operand 1']
    #allocation6 [shape = 's32[2]{0}', space=sflag, size = 0x8, scoped, tag = 'scoped memory for tpu_custom_call.1']
    #allocation7 [shape = 'u8[4096]{0}', space=vmem, size = 0x1000, scoped, tag = 'input window, operand 2']
    #allocation8 [shape = 'u8[8192]{0}', space=vmem, size = 0x2000, scoped, tag = 'input window, operand 3, single buffered']
    #allocation9 [shape = 's32[1]{0}', space=sflag, size = 0x4, scoped, tag = 'scoped memory for tpu_custom_call.1']
    #allocation10 [shape = 'u8[8192]{0}', space=vmem, size = 0x2000, scoped, tag = 'input window, operand 4, single buffered']
    #allocation11 [shape = 'u8[8192]{0}', space=vmem, size = 0x2000, scoped, tag = 'input window, operand 5, single buffered']
    #allocation12 [shape = 's32[1]{0}', space=sflag, size = 0x4, scoped, tag = 'scoped memory for tpu_custom_call.1']
    #allocation13 [shape = 'u8[4096]{0}', space=vmem, size = 0x1000, scoped, tag = 'output window, operand 0']
    #allocation14 [shape = 'u8[4096]{0}', space=vmem, size = 0x1000, scoped, tag = 'output window, operand 1']
    #allocation15 [shape = 's32[2]{0}', space=sflag, size = 0x8, scoped, tag = 'scoped memory for tpu_custom_call.1']
    #allocation16 [shape = 'u8[4096]{0}', space=vmem, size = 0x1000, scoped, tag = 'output window, operand 2']
    %14 = vsyncpa [#allocation3], 0
    %s15 = scalar_lea.sflag [#allocation3], 1
    %16 = vsyncpa %s15, 0
    %17 = vsyncpa [#allocation6], 0
    %s18 = scalar_lea.sflag [#allocation6], 1
    %19 = vsyncpa %s18, 0
    %20 = vsyncpa [#allocation9], 0
    %21 = vsyncpa [#allocation12], 0
    %22 = vsyncpa [#allocation4], 0
    %s23 = scalar_lea.sflag [#allocation4], 1
    %24 = vsyncpa %s23, 0
    %25 = vsyncpa [#allocation15], 0
    %s26 = scalar_lea.sflag [#allocation15], 1
    %27 = vsyncpa %s26, 0
    loop: start=0, step=1, limit=4
    $region2: #{tpu_custom_call.1} parent=1 // loop_pre_header
      _
    $region3: #{tpu_custom_call.1} parent=1 // loop_header
      %s29 = sphi 0, %s33
      %p30 = scmp.ge.s32.totalorder %s29, 4
      %s36 = sphi 0, %s48
      %s37 = sphi 0, %s44
      %s38 = sphi 0, %s36
      %s39 = sphi 0, %s37
      %s40 = sphi 0, %s38
      %s41 = sphi 0, %s39
      %s53 = sphi 0, %s55
      %s56 = sphi 0, %s53
      %s57 = sphi 0, %s56
      %s73 = sphi 0, %s57
      %s81 = sphi 0, %s83
      %s84 = sphi 0, %s81
      %s85 = sphi 0, %s84
      %s101 = sphi 0, %s85
      %s109 = sphi 0, %s111
      %s112 = sphi 0, %s109
      %s113 = sphi 0, %s112
      %s129 = sphi 0, %s113
      %s133 = sphi 0, %s133
      %s135 = sphi 0, %s133
      %s136 = sphi 0, %s135
      %s150 = sphi 0, %s136
      %s154 = sphi 0, %s154
      %s156 = sphi 0, %s154
      %s157 = sphi 0, %s156
      %s171 = sphi 0, %s157
      %s175 = sphi 0, %s175
      %s177 = sphi 0, %s175
      %s178 = sphi 0, %s177
      %s192 = sphi 0, %s178
      %s200 = sphi 0, %s202
      %s203 = sphi 0, %s200
      %s204 = sphi 0, %s203
      %s220 = sphi 0, %s204
      %s228 = sphi 0, %s230
      %s231 = sphi 0, %s228
      %s232 = sphi 0, %s231
      %s248 = sphi 0, %s232
      %s256 = sphi 0, %s258
      %s259 = sphi 0, %s256
      %s260 = sphi 0, %s259
      %s276 = sphi 0, %s260
    $region4: #{tpu_custom_call.1} parent=1 // loop_header_branch
      %32 = sbr.rel (%p30) target = $region8
    $region5: #{tpu_custom_call.1} parent=1 // loop_body
      %s34 = ssub.s32 %s29, 1
      %s35 = ssub.s32 %s29, 2
      %s42 = sadd.s32 1, %s37
      %p43 = scmp.ge.s32.totalorder %s42, 1
      %s44 = scalar_select %p43, 0, %s42
      %s45 = sadd.s32 1, %s36
      %s46 = scalar_select %p43, %s45, %s36
      %p47 = scmp.ge.s32.totalorder %s46, 2
      %s48 = scalar_select %p47, 0, %s46
      %s49 = ssub.s32 %s36, %s48
      %s50 = ssub.s32 %s37, %s44
      %s51 = sor.u32 %s49, %s50
      %p52 = scmp.eq.s32.totalorder %s51, 0
      %s54 = sadd.s32 %s53, 1
      %s55 = scalar_select %p52, %s53, %s54
      %p58 = pneg %p52
      %p59 = scmp.eq.s32.totalorder %s29, 1
      %p60 = por %p58, %p59
      %p61 = scmp.ne.s32.totalorder %s53, %s56
      %p62 = scmp.eq.s32.totalorder %s29, 0
      %p63 = por %p61, %p62
      %p64 = scmp.ne.s32.totalorder %s53, %s56
      %p65 = scmp.eq.s32.totalorder %s34, 1
      %p66 = por %p64, %p65
      %p67 = scmp.ne.s32.totalorder %s56, %s57
      %p68 = scmp.eq.s32.totalorder %s34, 0
      %p69 = por %p67, %p68
      %p70 = scmp.ne.s32.totalorder %s56, %s57
      %p71 = scmp.eq.s32.totalorder %s35, 1
      %p72 = por %p70, %p71
      %p74 = scmp.ne.s32.totalorder %s57, %s73
      %p75 = scmp.eq.s32.totalorder %s35, 0
      %p76 = por %p74, %p75
      %s77 = ssub.s32 %s36, %s48
      %s78 = ssub.s32 %s37, %s44
      %s79 = sor.u32 %s77, %s78
      %p80 = scmp.eq.s32.totalorder %s79, 0
      %s82 = sadd.s32 %s81, 1
      %s83 = scalar_select %p80, %s81, %s82
      %p86 = pneg %p80
      %p87 = scmp.eq.s32.totalorder %s29, 1
      %p88 = por %p86, %p87
      %p89 = scmp.ne.s32.totalorder %s81, %s84
      %p90 = scmp.eq.s32.totalorder %s29, 0
      %p91 = por %p89, %p90
      %p92 = scmp.ne.s32.totalorder %s81, %s84
      %p93 = scmp.eq.s32.totalorder %s34, 1
      %p94 = por %p92, %p93
      %p95 = scmp.ne.s32.totalorder %s84, %s85
      %p96 = scmp.eq.s32.totalorder %s34, 0
      %p97 = por %p95, %p96
      %p98 = scmp.ne.s32.totalorder %s84, %s85
      %p99 = scmp.eq.s32.totalorder %s35, 1
      %p100 = por %p98, %p99
      %p102 = scmp.ne.s32.totalorder %s85, %s101
      %p103 = scmp.eq.s32.totalorder %s35, 0
      %p104 = por %p102, %p103
      %s105 = ssub.s32 %s36, %s48
      %s106 = ssub.s32 %s37, %s44
      %s107 = sor.u32 %s105, %s106
      %p108 = scmp.eq.s32.totalorder %s107, 0
      %s110 = sadd.s32 %s109, 1
      %s111 = scalar_select %p108, %s109, %s110
      %p114 = pneg %p108
      %p115 = scmp.eq.s32.totalorder %s29, 1
      %p116 = por %p114, %p115
      %p117 = scmp.ne.s32.totalorder %s109, %s112
      %p118 = scmp.eq.s32.totalorder %s29, 0
      %p119 = por %p117, %p118
      %p120 = scmp.ne.s32.totalorder %s109, %s112
      %p121 = scmp.eq.s32.totalorder %s34, 1
      %p122 = por %p120, %p121
      %p123 = scmp.ne.s32.totalorder %s112, %s113
      %p124 = scmp.eq.s32.totalorder %s34, 0
      %p125 = por %p123, %p124
      %p126 = scmp.ne.s32.totalorder %s112, %s113
      %p127 = scmp.eq.s32.totalorder %s35, 1
      %p128 = por %p126, %p127
      %p130 = scmp.ne.s32.totalorder %s113, %s129
      %p131 = scmp.eq.s32.totalorder %s35, 0
      %p132 = por %p130, %p131
      %s134 = sadd.s32 %s133, 1
      %p137 = scmp.eq.s32.totalorder %s29, 1
      %p138 = scmp.ne.s32.totalorder %s133, %s135
      %p139 = scmp.eq.s32.totalorder %s29, 0
      %p140 = por %p138, %p139
      %p141 = scmp.ne.s32.totalorder %s133, %s135
      %p142 = scmp.eq.s32.totalorder %s34, 1
      %p143 = por %p141, %p142
      %p144 = scmp.ne.s32.totalorder %s135, %s136
      %p145 = scmp.eq.s32.totalorder %s34, 0
      %p146 = por %p144, %p145
      %p147 = scmp.ne.s32.totalorder %s135, %s136
      %p148 = scmp.eq.s32.totalorder %s35, 1
      %p149 = por %p147, %p148
      %p151 = scmp.ne.s32.totalorder %s136, %s150
      %p152 = scmp.eq.s32.totalorder %s35, 0
      %p153 = por %p151, %p152
      %s155 = sadd.s32 %s154, 1
      %p158 = scmp.eq.s32.totalorder %s29, 1
      %p159 = scmp.ne.s32.totalorder %s154, %s156
      %p160 = scmp.eq.s32.totalorder %s29, 0
      %p161 = por %p159, %p160
      %p162 = scmp.ne.s32.totalorder %s154, %s156
      %p163 = scmp.eq.s32.totalorder %s34, 1
      %p164 = por %p162, %p163
      %p165 = scmp.ne.s32.totalorder %s156, %s157
      %p166 = scmp.eq.s32.totalorder %s34, 0
      %p167 = por %p165, %p166
      %p168 = scmp.ne.s32.totalorder %s156, %s157
      %p169 = scmp.eq.s32.totalorder %s35, 1
      %p170 = por %p168, %p169
      %p172 = scmp.ne.s32.totalorder %s157, %s171
      %p173 = scmp.eq.s32.totalorder %s35, 0
      %p174 = por %p172, %p173
      %s176 = sadd.s32 %s175, 1
      %p179 = scmp.eq.s32.totalorder %s29, 1
      %p180 = scmp.ne.s32.totalorder %s175, %s177
      %p181 = scmp.eq.s32.totalorder %s29, 0
      %p182 = por %p180, %p181
      %p183 = scmp.ne.s32.totalorder %s175, %s177
      %p184 = scmp.eq.s32.totalorder %s34, 1
      %p185 = por %p183, %p184
      %p186 = scmp.ne.s32.totalorder %s177, %s178
      %p187 = scmp.eq.s32.totalorder %s34, 0
      %p188 = por %p186, %p187
      %p189 = scmp.ne.s32.totalorder %s177, %s178
      %p190 = scmp.eq.s32.totalorder %s35, 1
      %p191 = por %p189, %p190
      %p193 = scmp.ne.s32.totalorder %s178, %s192
      %p194 = scmp.eq.s32.totalorder %s35, 0
      %p195 = por %p193, %p194
      %s196 = ssub.s32 %s36, %s48
      %s197 = ssub.s32 %s37, %s44
      %s198 = sor.u32 %s196, %s197
      %p199 = scmp.eq.s32.totalorder %s198, 0
      %s201 = sadd.s32 %s200, 1
      %s202 = scalar_select %p199, %s200, %s201
      %p205 = pneg %p199
      %p206 = scmp.eq.s32.totalorder %s29, 1
      %p207 = por %p205, %p206
      %p208 = scmp.ne.s32.totalorder %s200, %s203
      %p209 = scmp.eq.s32.totalorder %s29, 0
      %p210 = por %p208, %p209
      %p211 = scmp.ne.s32.totalorder %s200, %s203
      %p212 = scmp.eq.s32.totalorder %s34, 1
      %p213 = por %p211, %p212
      %p214 = scmp.ne.s32.totalorder %s203, %s204
      %p215 = scmp.eq.s32.totalorder %s34, 0
      %p216 = por %p214, %p215
      %p217 = scmp.ne.s32.totalorder %s203, %s204
      %p218 = scmp.eq.s32.totalorder %s35, 1
      %p219 = por %p217, %p218
      %p221 = scmp.ne.s32.totalorder %s204, %s220
      %p222 = scmp.eq.s32.totalorder %s35, 0
      %p223 = por %p221, %p222
      %s224 = ssub.s32 %s36, %s48
      %s225 = ssub.s32 %s37, %s44
      %s226 = sor.u32 %s224, %s225
      %p227 = scmp.eq.s32.totalorder %s226, 0
      %s229 = sadd.s32 %s228, 1
      %s230 = scalar_select %p227, %s228, %s229
      %p233 = pneg %p227
      %p234 = scmp.eq.s32.totalorder %s29, 1
      %p235 = por %p233, %p234
      %p236 = scmp.ne.s32.totalorder %s228, %s231
      %p237 = scmp.eq.s32.totalorder %s29, 0
      %p238 = por %p236, %p237
      %p239 = scmp.ne.s32.totalorder %s228, %s231
      %p240 = scmp.eq.s32.totalorder %s34, 1
      %p241 = por %p239, %p240
      %p242 = scmp.ne.s32.totalorder %s231, %s232
      %p243 = scmp.eq.s32.totalorder %s34, 0
      %p244 = por %p242, %p243
      %p245 = scmp.ne.s32.totalorder %s231, %s232
      %p246 = scmp.eq.s32.totalorder %s35, 1
      %p247 = por %p245, %p246
      %p249 = scmp.ne.s32.totalorder %s232, %s248
      %p250 = scmp.eq.s32.totalorder %s35, 0
      %p251 = por %p249, %p250
      %s252 = ssub.s32 %s36, %s48
      %s253 = ssub.s32 %s37, %s44
      %s254 = sor.u32 %s252, %s253
      %p255 = scmp.eq.s32.totalorder %s254, 0
      %s257 = sadd.s32 %s256, 1
      %s258 = scalar_select %p255, %s256, %s257
      %p261 = pneg %p255
      %p262 = scmp.eq.s32.totalorder %s29, 1
      %p263 = por %p261, %p262
      %p264 = scmp.ne.s32.totalorder %s256, %s259
      %p265 = scmp.eq.s32.totalorder %s29, 0
      %p266 = por %p264, %p265
      %p267 = scmp.ne.s32.totalorder %s256, %s259
      %p268 = scmp.eq.s32.totalorder %s34, 1
      %p269 = por %p267, %p268
      %p270 = scmp.ne.s32.totalorder %s259, %s260
      %p271 = scmp.eq.s32.totalorder %s34, 0
      %p272 = por %p270, %p271
      %p273 = scmp.ne.s32.totalorder %s259, %s260
      %p274 = scmp.eq.s32.totalorder %s35, 1
      %p275 = por %p273, %p274
      %p277 = scmp.ne.s32.totalorder %s260, %s276
      %p278 = scmp.eq.s32.totalorder %s35, 0
      %p279 = por %p277, %p278
      %p280 = scmp.le.s32.totalorder 1, %s29
      %p281 = scmp.lt.s32.totalorder %s29, 3
      %p282 = pnand %p280, %p281
      %p283 = pneg %p282
      // Predicated region
      $region9: #{tpu_custom_call.1} parent=5 // pred_check
        _
      $region10: #{tpu_custom_call.1} parent=5 // pred_check_branch
        %285 = sbr.rel (%p282) target = $region12
      $region11: #{tpu_custom_call.1} parent=5 // pred_region
        %s286 = ssub.s32 %s29, 1
        // Predicated region
        $region13: #{tpu_custom_call.1} parent=11 // pred_check
          %p287 = pneg %p146
        $region14: #{tpu_custom_call.1} parent=11 // pred_check_branch
          %289 = sbr.rel (%p287) target = $region16
        $region15: #{tpu_custom_call.1} parent=11 // pred_region
          %s291 = ssub.s32 256, 256
          %292 = vsyncadd [#allocation9], %s291
          %s293 = sshll.u32 [#allocation8], 4
          %s294 = int_to_ptr.vmem [resolvable:$true] %s293
          %299 = dma.hbm_to_vmem [thread:$0]  %s3, 256, %s294, [#allocation9], 64, 64, 4
        $region16: #{tpu_custom_call.1} parent=11 // pred_fallthru
          _
        // Predicated region
        $region17: #{tpu_custom_call.1} parent=11 // pred_check
          %p300 = pneg %p167
        $region18: #{tpu_custom_call.1} parent=11 // pred_check_branch
          %302 = sbr.rel (%p300) target = $region20
        $region19: #{tpu_custom_call.1} parent=11 // pred_region
          %s304 = ssub.s32 256, 256
          %305 = vsyncadd [#allocation9], %s304
          %s306 = sshll.u32 [#allocation10], 4
          %s307 = int_to_ptr.vmem [resolvable:$true] %s306
          %312 = dma.hbm_to_vmem [thread:$0]  %s4, 256, %s307, [#allocation9], 64, 64, 4
        $region20: #{tpu_custom_call.1} parent=11 // pred_fallthru
          _
        // Predicated region
        $region21: #{tpu_custom_call.1} parent=11 // pred_check
          %p313 = pneg %p188
        $region22: #{tpu_custom_call.1} parent=11 // pred_check_branch
          %315 = sbr.rel (%p313) target = $region24
        $region23: #{tpu_custom_call.1} parent=11 // pred_region
          %s317 = ssub.s32 256, 256
          %318 = vsyncadd [#allocation12], %s317
          %s319 = sshll.u32 [#allocation11], 4
          %s320 = int_to_ptr.vmem [resolvable:$true] %s319
          %325 = dma.hbm_to_vmem [thread:$0]  %s5, 256, %s320, [#allocation12], 64, 64, 4
        $region24: #{tpu_custom_call.1} parent=11 // pred_fallthru
          _
      $region12: #{tpu_custom_call.1} parent=5 // pred_fallthru
        _
      %p326 = scmp.lt.s32.totalorder %s29, 2
      // Predicated region
      $region25: #{tpu_custom_call.1} parent=5 // pred_check
        %p327 = pneg %p326
      $region26: #{tpu_custom_call.1} parent=5 // pred_check_branch
        %329 = sbr.rel (%p327) target = $region28
      $region27: #{tpu_custom_call.1} parent=5 // pred_region
        // Predicated region
        $region29: #{tpu_custom_call.1} parent=27 // pred_check
          %p330 = pneg %p63
        $region30: #{tpu_custom_call.1} parent=27 // pred_check_branch
          %332 = sbr.rel (%p330) target = $region32
        $region31: #{tpu_custom_call.1} parent=27 // pred_region
          %s333 = sand.u32 %s53, 1
          %s334 = scalar_lea.sflag [#allocation3], %s333
          %s335 = sand.u32 %s53, 1
          %s336 = smul.addr %s335, 4
          %s337 = scalar_lea.vmem [#allocation2], %s336
          %s339 = ssub.s32 64, 64
          %340 = vsyncadd %s334, %s339
          %s341 = sadd.s32 %s37, %s36
          %s342 = smul.addr %s341, 64
          %s343 = scalar_lea.hbm %s0, %s342
          %s345 = sshll.u32 %s337, 4
          %s346 = int_to_ptr.vmem [resolvable:$true] %s345
          %348 = dma.hbm_to_vmem [thread:$0]  %s343, 64, %s346, %s334
        $region32: #{tpu_custom_call.1} parent=27 // pred_fallthru
          _
        // Predicated region
        $region33: #{tpu_custom_call.1} parent=27 // pred_check
          %p349 = pneg %p91
        $region34: #{tpu_custom_call.1} parent=27 // pred_check_branch
          %351 = sbr.rel (%p349) target = $region36
        $region35: #{tpu_custom_call.1} parent=27 // pred_region
          %s352 = sand.u32 %s29, 1
          %s353 = scalar_lea.sflag [#allocation6], %s352
          %s354 = sand.u32 %s81, 1
          %s355 = smul.addr %s354, 4
          %s356 = scalar_lea.vmem [#allocation5], %s355
          %s358 = ssub.s32 64, 64
          %359 = vsyncadd %s353, %s358
          %s360 = sadd.s32 %s37, %s36
          %s361 = smul.addr %s360, 64
          %s362 = scalar_lea.hbm %s1, %s361
          %s364 = sshll.u32 %s356, 4
          %s365 = int_to_ptr.vmem [resolvable:$true] %s364
          %367 = dma.hbm_to_vmem [thread:$0]  %s362, 64, %s365, %s353
        $region36: #{tpu_custom_call.1} parent=27 // pred_fallthru
          _
        // Predicated region
        $region37: #{tpu_custom_call.1} parent=27 // pred_check
          %p368 = pneg %p119
        $region38: #{tpu_custom_call.1} parent=27 // pred_check_branch
          %370 = sbr.rel (%p368) target = $region40
        $region39: #{tpu_custom_call.1} parent=27 // pred_region
          %s371 = sand.u32 %s29, 1
          %s372 = scalar_lea.sflag [#allocation6], %s371
          %s373 = sand.u32 %s109, 1
          %s374 = smul.addr %s373, 4
          %s375 = scalar_lea.vmem [#allocation7], %s374
          %s377 = ssub.s32 64, 64
          %378 = vsyncadd %s372, %s377
          %s379 = sadd.s32 %s37, %s36
          %s380 = smul.addr %s379, 64
          %s381 = scalar_lea.hbm %s2, %s380
          %s383 = sshll.u32 %s375, 4
          %s384 = int_to_ptr.vmem [resolvable:$true] %s383
          %386 = dma.hbm_to_vmem [thread:$0]  %s381, 64, %s384, %s372
        $region40: #{tpu_custom_call.1} parent=27 // pred_fallthru
          _
      $region28: #{tpu_custom_call.1} parent=5 // pred_fallthru
        _
      %p387 = scmp.le.s32.totalorder 1, %s29
      %p388 = scmp.lt.s32.totalorder %s29, 3
      %p389 = pnand %p387, %p388
      %p390 = pneg %p389
      // Predicated region
      $region41: #{tpu_custom_call.1} parent=5 // pred_check
        _
      $region42: #{tpu_custom_call.1} parent=5 // pred_check_branch
        %392 = sbr.rel (%p389) target = $region44
      $region43: #{tpu_custom_call.1} parent=5 // pred_region
        %s393 = ssub.s32 %s29, 1
        %s394 = sand.u32 %s56, 1
        %s395 = scalar_lea.sflag [#allocation3], %s394
        %s396 = sand.u32 %s56, 1
        %s397 = smul.addr %s396, 4
        %s398 = scalar_lea.vmem [#allocation2], %s397
        // Predicated region
        $region45: #{tpu_custom_call.1} parent=43 // pred_check
          %p399 = pneg %p69
        $region46: #{tpu_custom_call.1} parent=43 // pred_check_branch
          %401 = sbr.rel (%p399) target = $region48
        $region47: #{tpu_custom_call.1} parent=43 // pred_region
          %402 = dma.done %s395, 64
        $region48: #{tpu_custom_call.1} parent=43 // pred_fallthru
          _
        %s403 = sand.u32 %s34, 1
        %s404 = scalar_lea.sflag [#allocation6], %s403
        %s405 = sand.u32 %s84, 1
        %s406 = smul.addr %s405, 4
        %s407 = scalar_lea.vmem [#allocation5], %s406
        // Predicated region
        $region49: #{tpu_custom_call.1} parent=43 // pred_check
          %p408 = pneg %p97
        $region50: #{tpu_custom_call.1} parent=43 // pred_check_branch
          %410 = sbr.rel (%p408) target = $region52
        $region51: #{tpu_custom_call.1} parent=43 // pred_region
          %411 = dma.done %s404, 64
        $region52: #{tpu_custom_call.1} parent=43 // pred_fallthru
          _
        %s412 = sand.u32 %s34, 1
        %s413 = scalar_lea.sflag [#allocation6], %s412
        %s414 = sand.u32 %s112, 1
        %s415 = smul.addr %s414, 4
        %s416 = scalar_lea.vmem [#allocation7], %s415
        // Predicated region
        $region53: #{tpu_custom_call.1} parent=43 // pred_check
          %p417 = pneg %p125
        $region54: #{tpu_custom_call.1} parent=43 // pred_check_branch
          %419 = sbr.rel (%p417) target = $region56
        $region55: #{tpu_custom_call.1} parent=43 // pred_region
          %420 = dma.done %s413, 64
        $region56: #{tpu_custom_call.1} parent=43 // pred_fallthru
          _
        // Predicated region
        $region57: #{tpu_custom_call.1} parent=43 // pred_check
          %p421 = pneg %p146
        $region58: #{tpu_custom_call.1} parent=43 // pred_check_branch
          %423 = sbr.rel (%p421) target = $region60
        $region59: #{tpu_custom_call.1} parent=43 // pred_region
          %424 = dma.done [#allocation9], 256
        $region60: #{tpu_custom_call.1} parent=43 // pred_fallthru
          _
        // Predicated region
        $region61: #{tpu_custom_call.1} parent=43 // pred_check
          %p425 = pneg %p167
        $region62: #{tpu_custom_call.1} parent=43 // pred_check_branch
          %427 = sbr.rel (%p425) target = $region64
        $region63: #{tpu_custom_call.1} parent=43 // pred_region
          %428 = dma.done [#allocation9], 256
        $region64: #{tpu_custom_call.1} parent=43 // pred_fallthru
          _
        // Predicated region
        $region65: #{tpu_custom_call.1} parent=43 // pred_check
          %p429 = pneg %p188
        $region66: #{tpu_custom_call.1} parent=43 // pred_check_branch
          %431 = sbr.rel (%p429) target = $region68
        $region67: #{tpu_custom_call.1} parent=43 // pred_region
          %432 = dma.done [#allocation12], 256
        $region68: #{tpu_custom_call.1} parent=43 // pred_fallthru
          _
        %s433 = sand.u32 %s56, 1
        %s434 = scalar_lea.sflag [#allocation3], %s433
        %s435 = sand.u32 %s56, 1
        %s436 = smul.addr %s435, 4
        %s437 = scalar_lea.vmem [#allocation2], %s436
        %p438 = pneg %p69
        %p439 = pneg %p66
        %s440 = sand.u32 %s34, 1
        %s441 = scalar_lea.sflag [#allocation6], %s440
        %s442 = sand.u32 %s84, 1
        %s443 = smul.addr %s442, 4
        %s444 = scalar_lea.vmem [#allocation5], %s443
        %p445 = pneg %p97
        %p446 = pneg %p94
        %s447 = sand.u32 %s34, 1
        %s448 = scalar_lea.sflag [#allocation6], %s447
        %s449 = sand.u32 %s112, 1
        %s450 = smul.addr %s449, 4
        %s451 = scalar_lea.vmem [#allocation7], %s450
        %p452 = pneg %p125
        %p453 = pneg %p122
        %p454 = pneg %p146
        %p455 = pneg %p143
        %p456 = pneg %p167
        %p457 = pneg %p164
        %p458 = pneg %p188
        %p459 = pneg %p185
        %p460 = pneg %p216
        %p461 = pneg %p213
        %s462 = sand.u32 %s203, 1
        %s463 = scalar_lea.sflag [#allocation4], %s462
        %s464 = sand.u32 %s203, 1
        %s465 = smul.addr %s464, 4
        %s466 = scalar_lea.vmem [#allocation13], %s465
        %p467 = pneg %p244
        %p468 = pneg %p241
        %s469 = sand.u32 %s34, 1
        %s470 = scalar_lea.sflag [#allocation15], %s469
        %s471 = sand.u32 %s231, 1
        %s472 = smul.addr %s471, 4
        %s473 = scalar_lea.vmem [#allocation14], %s472
        %p474 = pneg %p272
        %p475 = pneg %p269
        %s476 = sand.u32 %s34, 1
        %s477 = scalar_lea.sflag [#allocation15], %s476
        %s478 = sand.u32 %s259, 1
        %s479 = smul.addr %s478, 4
        %s480 = scalar_lea.vmem [#allocation16], %s479
        %v482 = vld [vmem:[%s398] sm:$0xf]
        %v483 = vld [vmem:[#allocation8] sm:$0xf]
        %v484 = vld [vmem:[#allocation8 + $0x4] sm:$0xf]
        %v485 = vld [vmem:[#allocation8 + $0x8] sm:$0xf]
        %v486 = vld [vmem:[#allocation8 + $0xc] sm:$0xf]
        %v491 = vunpack.c.l.b16 %v483
        %v492 = vunpack.c.l.b16 %v484
        %v493 = vunpack.c.l.b16 %v485
        %v494 = vunpack.c.l.b16 %v486
        %v495 = vpack.c.b16 %v492, %v491
        %v496 = vpack.c.b16 %v494, %v493
        %vm499 = vcmask 261120
        %v501 = vsel %vm499, %v482, 0
        %503 = vmatprep.subr.bf16.mxu0 0
        %504 = vmatpush1.bf16.msra.mxu0 0
        %505 = vmatprep.subr.bf16.mxu0 0
        %506 = vmatpush1.bf16.msra.mxu0 0
        %507 = vmatprep.subr.bf16.mxu0 0
        %508 = vmatpush1.bf16.msra.mxu0 0
        %509 = vmatprep.subr.bf16.mxu0 0
        %510 = vmatpush1.bf16.msra.mxu0 0
        %511 = vmatprep.subr.bf16.mxu0 0
        %512 = vmatpush1.bf16.msra.mxu0 0
        %513 = vmatprep.subr.bf16.mxu0 0
        %514 = vmatpush1.bf16.msra.mxu0 0
        %515 = vmatprep.subr.bf16.mxu0 0
        %516 = vmatpush1.bf16.msra.mxu0 %v496
        %517 = vmatprep.subr.bf16.mxu0 0
        %518 = vmatpush1.bf16.msra.mxu0 %v495
        %519 = vmatprep.subr.bf16.mxu0 0
        %520 = vmatpush2.bf16.msra.mxu0 0
        %521 = vmatprep.subr.bf16.mxu0 0
        %522 = vmatpush2.bf16.msra.mxu0 0
        %523 = vmatprep.subr.bf16.mxu0 0
        %524 = vmatpush2.bf16.msra.mxu0 0
        %525 = vmatprep.subr.bf16.mxu0 0
        %526 = vmatpush2.bf16.msra.mxu0 0
        %527 = vmatprep.subr.bf16.mxu0 0
        %528 = vmatpush2.bf16.msra.mxu0 0
        %529 = vmatprep.subr.bf16.mxu0 0
        %530 = vmatpush2.bf16.msra.mxu0 0
        %531 = vmatprep.subr.bf16.mxu0 0
        %532 = vmatpush2.bf16.msra.mxu0 0
        %533 = vmatprep.subr.bf16.mxu0 0
        %534 = vmatpush2.bf16.msra.mxu0 0
        %535 = vmatprep.mubr.bf16.mxu0 0
        %536 = vmatmul.mubr.bf16.gmra.mxu0 %v501
        %v537 = vpop.f32.mrf.mxu0
        %v538 = vadd.f32 0.0, %v537
        %v539 = vpop.f32.mrf.mxu0
        %v540 = vpop.f32.mrf.mxu0
        %v541 = vpop.f32.mrf.mxu0
        %542 = vdwg.mxu0
        %v543 = vpack.c.bf16 %v538, %v538
        %vm544 = vcmask 257024
        %545 = vst.msk [vmem:[%s466] sm:$0xf] %vm544, %v543
        %v546 = vld [vmem:[%s407] sm:$0xf]
        %v547 = vld [vmem:[#allocation10] sm:$0xf]
        %v548 = vld [vmem:[#allocation10 + $0x4] sm:$0xf]
        %v549 = vld [vmem:[#allocation10 + $0x8] sm:$0xf]
        %v550 = vld [vmem:[#allocation10 + $0xc] sm:$0xf]
        %v555 = vunpack.c.l.b16 %v547
        %v556 = vunpack.c.l.b16 %v548
        %v557 = vunpack.c.l.b16 %v549
        %v558 = vunpack.c.l.b16 %v550
        %v559 = vpack.c.b16 %v556, %v555
        %v560 = vpack.c.b16 %v558, %v557
        %v564 = vsel %vm499, %v546, 0
        %566 = vmatprep.subr.bf16.mxu0 0
        %567 = vmatpush1.bf16.msra.mxu0 0
        %568 = vmatprep.subr.bf16.mxu0 0
        %569 = vmatpush1.bf16.msra.mxu0 0
        %570 = vmatprep.subr.bf16.mxu0 0
        %571 = vmatpush1.bf16.msra.mxu0 0
        %572 = vmatprep.subr.bf16.mxu0 0
        %573 = vmatpush1.bf16.msra.mxu0 0
        %574 = vmatprep.subr.bf16.mxu0 0
        %575 = vmatpush1.bf16.msra.mxu0 0
        %576 = vmatprep.subr.bf16.mxu0 0
        %577 = vmatpush1.bf16.msra.mxu0 0
        %578 = vmatprep.subr.bf16.mxu0 0
        %579 = vmatpush1.bf16.msra.mxu0 %v560
        %580 = vmatprep.subr.bf16.mxu0 0
        %581 = vmatpush1.bf16.msra.mxu0 %v559
        %582 = vmatprep.subr.bf16.mxu0 0
        %583 = vmatpush2.bf16.msra.mxu0 0
        %584 = vmatprep.subr.bf16.mxu0 0
        %585 = vmatpush2.bf16.msra.mxu0 0
        %586 = vmatprep.subr.bf16.mxu0 0
        %587 = vmatpush2.bf16.msra.mxu0 0
        %588 = vmatprep.subr.bf16.mxu0 0
        %589 = vmatpush2.bf16.msra.mxu0 0
        %590 = vmatprep.subr.bf16.mxu0 0
        %591 = vmatpush2.bf16.msra.mxu0 0
        %592 = vmatprep.subr.bf16.mxu0 0
        %593 = vmatpush2.bf16.msra.mxu0 0
        %594 = vmatprep.subr.bf16.mxu0 0
        %595 = vmatpush2.bf16.msra.mxu0 0
        %596 = vmatprep.subr.bf16.mxu0 0
        %597 = vmatpush2.bf16.msra.mxu0 0
        %598 = vmatprep.mubr.bf16.mxu0 0
        %599 = vmatmul.mubr.bf16.gmra.mxu0 %v564
        %v600 = vpop.f32.mrf.mxu0
        %v601 = vadd.f32 0.0, %v600
        %v602 = vpop.f32.mrf.mxu0
        %v603 = vpop.f32.mrf.mxu0
        %v604 = vpop.f32.mrf.mxu0
        %605 = vdwg.mxu0
        %v606 = vpack.c.bf16 %v601, %v601
        %607 = vst.msk [vmem:[%s473] sm:$0xf] %vm544, %v606
        %v608 = vld [vmem:[%s416] sm:$0xf]
        %v609 = vld [vmem:[#allocation11] sm:$0xf]
        %v610 = vld [vmem:[#allocation11 + $0x4] sm:$0xf]
        %v611 = vld [vmem:[#allocation11 + $0x8] sm:$0xf]
        %v612 = vld [vmem:[#allocation11 + $0xc] sm:$0xf]
        %v617 = vunpack.c.l.b16 %v609
        %v618 = vunpack.c.l.b16 %v610
        %v619 = vunpack.c.l.b16 %v611
        %v620 = vunpack.c.l.b16 %v612
        %v621 = vpack.c.b16 %v618, %v617
        %v622 = vpack.c.b16 %v620, %v619
        %v626 = vsel %vm499, %v608, 0
        %628 = vmatprep.subr.bf16.mxu0 0
        %629 = vmatpush1.bf16.msra.mxu0 0
        %630 = vmatprep.subr.bf16.mxu0 0
        %631 = vmatpush1.bf16.msra.mxu0 0
        %632 = vmatprep.subr.bf16.mxu0 0
        %633 = vmatpush1.bf16.msra.mxu0 0
        %634 = vmatprep.subr.bf16.mxu0 0
        %635 = vmatpush1.bf16.msra.mxu0 0
        %636 = vmatprep.subr.bf16.mxu0 0
        %637 = vmatpush1.bf16.msra.mxu0 0
        %638 = vmatprep.subr.bf16.mxu0 0
        %639 = vmatpush1.bf16.msra.mxu0 0
        %640 = vmatprep.subr.bf16.mxu0 0
        %641 = vmatpush1.bf16.msra.mxu0 %v622
        %642 = vmatprep.subr.bf16.mxu0 0
        %643 = vmatpush1.bf16.msra.mxu0 %v621
        %644 = vmatprep.subr.bf16.mxu0 0
        %645 = vmatpush2.bf16.msra.mxu0 0
        %646 = vmatprep.subr.bf16.mxu0 0
        %647 = vmatpush2.bf16.msra.mxu0 0
        %648 = vmatprep.subr.bf16.mxu0 0
        %649 = vmatpush2.bf16.msra.mxu0 0
        %650 = vmatprep.subr.bf16.mxu0 0
        %651 = vmatpush2.bf16.msra.mxu0 0
        %652 = vmatprep.subr.bf16.mxu0 0
        %653 = vmatpush2.bf16.msra.mxu0 0
        %654 = vmatprep.subr.bf16.mxu0 0
        %655 = vmatpush2.bf16.msra.mxu0 0
        %656 = vmatprep.subr.bf16.mxu0 0
        %657 = vmatpush2.bf16.msra.mxu0 0
        %658 = vmatprep.subr.bf16.mxu0 0
        %659 = vmatpush2.bf16.msra.mxu0 0
        %660 = vmatprep.mubr.bf16.mxu0 0
        %661 = vmatmul.mubr.bf16.gmra.mxu0 %v626
        %v662 = vpop.f32.mrf.mxu0
        %v663 = vadd.f32 0.0, %v662
        %v664 = vpop.f32.mrf.mxu0
        %v665 = vpop.f32.mrf.mxu0
        %v666 = vpop.f32.mrf.mxu0
        %667 = vdwg.mxu0
        %v668 = vpack.c.bf16 %v663, %v663
        %669 = vst.msk [vmem:[%s480] sm:$0xf] %vm544, %v668
        %s670 = sand.u32 %s203, 1
        %s671 = scalar_lea.sflag [#allocation4], %s670
        %s672 = sand.u32 %s203, 1
        %s673 = smul.addr %s672, 4
        %s674 = scalar_lea.vmem [#allocation13], %s673
        %s675 = sand.u32 %s34, 1
        %s676 = scalar_lea.sflag [#allocation15], %s675
        %s677 = sand.u32 %s231, 1
        %s678 = smul.addr %s677, 4
        %s679 = scalar_lea.vmem [#allocation14], %s678
        %s680 = sand.u32 %s34, 1
        %s681 = scalar_lea.sflag [#allocation15], %s680
        %s682 = sand.u32 %s259, 1
        %s683 = smul.addr %s682, 4
        %s684 = scalar_lea.vmem [#allocation16], %s683
        // Predicated region
        $region69: #{tpu_custom_call.1} parent=43 // pred_check
          %p685 = pneg %p213
        $region70: #{tpu_custom_call.1} parent=43 // pred_check_branch
          %687 = sbr.rel (%p685) target = $region72
        $region71: #{tpu_custom_call.1} parent=43 // pred_region
          %s689 = ssub.s32 64, 64
          %690 = vsyncadd %s671, %s689
          %s691 = sadd.s32 %s39, %s38
          %s692 = smul.addr %s691, 64
          %s693 = scalar_lea.hbm %s6, %s692
          %s695 = sshll.u32 %s674, 4
          %s696 = int_to_ptr.vmem [resolvable:$true] %s695
          %698 = dma.vmem_to_hbm [thread:$0]  %s696, 64, %s693, %s671
        $region72: #{tpu_custom_call.1} parent=43 // pred_fallthru
          _
        // Predicated region
        $region73: #{tpu_custom_call.1} parent=43 // pred_check
          %p699 = pneg %p241
        $region74: #{tpu_custom_call.1} parent=43 // pred_check_branch
          %701 = sbr.rel (%p699) target = $region76
        $region75: #{tpu_custom_call.1} parent=43 // pred_region
          %s703 = ssub.s32 64, 64
          %704 = vsyncadd %s676, %s703
          %s705 = sadd.s32 %s39, %s38
          %s706 = smul.addr %s705, 64
          %s707 = scalar_lea.hbm %s7, %s706
          %s709 = sshll.u32 %s679, 4
          %s710 = int_to_ptr.vmem [resolvable:$true] %s709
          %712 = dma.vmem_to_hbm [thread:$0]  %s710, 64, %s707, %s676
        $region76: #{tpu_custom_call.1} parent=43 // pred_fallthru
          _
        // Predicated region
        $region77: #{tpu_custom_call.1} parent=43 // pred_check
          %p713 = pneg %p269
        $region78: #{tpu_custom_call.1} parent=43 // pred_check_branch
          %715 = sbr.rel (%p713) target = $region80
        $region79: #{tpu_custom_call.1} parent=43 // pred_region
          %s717 = ssub.s32 64, 64
          %718 = vsyncadd %s681, %s717
          %s719 = sadd.s32 %s39, %s38
          %s720 = smul.addr %s719, 64
          %s721 = scalar_lea.hbm %s8, %s720
          %s723 = sshll.u32 %s684, 4
          %s724 = int_to_ptr.vmem [resolvable:$true] %s723
          %726 = dma.vmem_to_hbm [thread:$0]  %s724, 64, %s721, %s681
        $region80: #{tpu_custom_call.1} parent=43 // pred_fallthru
          _
      $region44: #{tpu_custom_call.1} parent=5 // pred_fallthru
        _
      %p727 = scmp.le.s32.totalorder 2, %s29
      // Predicated region
      $region81: #{tpu_custom_call.1} parent=5 // pred_check
        %p728 = pneg %p727
      $region82: #{tpu_custom_call.1} parent=5 // pred_check_branch
        %730 = sbr.rel (%p728) target = $region84
      $region83: #{tpu_custom_call.1} parent=5 // pred_region
        %s731 = ssub.s32 %s29, 2
        // Predicated region
        $region85: #{tpu_custom_call.1} parent=83 // pred_check
          %p732 = pneg %p219
        $region86: #{tpu_custom_call.1} parent=83 // pred_check_branch
          %734 = sbr.rel (%p732) target = $region88
        $region87: #{tpu_custom_call.1} parent=83 // pred_region
          %s735 = sand.u32 %s204, 1
          %s736 = scalar_lea.sflag [#allocation4], %s735
          %s737 = sand.u32 %s204, 1
          %s738 = smul.addr %s737, 4
          %s739 = scalar_lea.vmem [#allocation13], %s738
          %740 = dma.done %s736, 64
        $region88: #{tpu_custom_call.1} parent=83 // pred_fallthru
          _
        // Predicated region
        $region89: #{tpu_custom_call.1} parent=83 // pred_check
          %p741 = pneg %p247
        $region90: #{tpu_custom_call.1} parent=83 // pred_check_branch
          %743 = sbr.rel (%p741) target = $region92
        $region91: #{tpu_custom_call.1} parent=83 // pred_region
          %s744 = sand.u32 %s35, 1
          %s745 = scalar_lea.sflag [#allocation15], %s744
          %s746 = sand.u32 %s232, 1
          %s747 = smul.addr %s746, 4
          %s748 = scalar_lea.vmem [#allocation14], %s747
          %749 = dma.done %s745, 64
        $region92: #{tpu_custom_call.1} parent=83 // pred_fallthru
          _
        // Predicated region
        $region93: #{tpu_custom_call.1} parent=83 // pred_check
          %p750 = pneg %p275
        $region94: #{tpu_custom_call.1} parent=83 // pred_check_branch
          %752 = sbr.rel (%p750) target = $region96
        $region95: #{tpu_custom_call.1} parent=83 // pred_region
          %s753 = sand.u32 %s35, 1
          %s754 = scalar_lea.sflag [#allocation15], %s753
          %s755 = sand.u32 %s260, 1
          %s756 = smul.addr %s755, 4
          %s757 = scalar_lea.vmem [#allocation16], %s756
          %758 = dma.done %s754, 64
        $region96: #{tpu_custom_call.1} parent=83 // pred_fallthru
          _
      $region84: #{tpu_custom_call.1} parent=5 // pred_fallthru
        _
    $region6: #{tpu_custom_call.1} parent=1 // loop_footer
      %s33 = sadd.s32 1, %s29
    $region7: #{tpu_custom_call.1} parent=1 // loop_footer_branch
      %28 = sbr.rel target = $region3
    $region8: #{tpu_custom_call.1} parent=1 // loop_exit
      _
    %759 = vsyncpa [#allocation3], 1
    %s760 = scalar_lea.sflag [#allocation3], 1
    %761 = vsyncpa %s760, 1
    %762 = vsyncpa [#allocation6], 1
    %s763 = scalar_lea.sflag [#allocation6], 1
    %764 = vsyncpa %s763, 1
    %765 = vsyncpa [#allocation9], 1
    %766 = vsyncpa [#allocation12], 1
    %767 = vsyncpa [#allocation4], 1
    %s768 = scalar_lea.sflag [#allocation4], 1
    %769 = vsyncpa %s768, 1
    %770 = vsyncpa [#allocation15], 1
    %s771 = scalar_lea.sflag [#allocation15], 1
    %772 = vsyncpa %s771, 1

// kernel: tpu_custom_call.1
$region0: #{tpu_custom_call.1}
  #allocation0 [shape = 'u32[]', space=smem, size = 0x4, offset = 0x4, fixed_abs, tag = 'smem constant byte address 0x4 - core index']
  #allocation1 [shape = 'u32[144,128]{1,0:T(1,128)}', space=vmem, size = 0x12000, scoped, tag = 'internal scratch']
  %s0 = inlined_call_operand.hbm [shape: bf16[2,8,32], index: 0, kind: input, shape index: {}]
  %s1 = inlined_call_operand.hbm [shape: bf16[2,8,32], index: 1, kind: input, shape index: {}]
  %s2 = inlined_call_operand.hbm [shape: bf16[2,8,32], index: 2, kind: input, shape index: {}]
  %s3 = inlined_call_operand.hbm [shape: bf16[32,32], index: 3, kind: input, shape index: {}]
  %s4 = inlined_call_operand.hbm [shape: bf16[32,32], index: 4, kind: input, shape index: {}]
  %s5 = inlined_call_operand.hbm [shape: bf16[32,32], index: 5, kind: input, shape index: {}]
  %s6 = inlined_call_operand.hbm [shape: bf16[2,8,32], index: 6, kind: output, shape index: {0}]
  %s7 = inlined_call_operand.hbm [shape: bf16[2,8,32], index: 7, kind: output, shape index: {1}]
  %s8 = inlined_call_operand.hbm [shape: bf16[2,8,32], index: 8, kind: output, shape index: {2}]
  %9 = xla_tuple %s6, %s7, %s8
  %s10 = sld [smem:[#allocation0]]
  $region97: #{tpu_custom_call.1} parent=0
    _
  %s12 = ssub.s32 1, %s10
  %s13 = scalar_select 0, %s12, %s10
  $region1: #{tpu_custom_call.1} parent=0
    #allocation2 [shape = 'u8[4096]{0}', space=vmem, size = 0x1000, scoped, tag = 'input window, operand 0']
    #allocation3 [shape = 's32[2]{0}', space=sflag, size = 0x8, scoped, tag = 'scoped memory for tpu_custom_call.1']
    #allocation4 [shape = 's32[2]{0}', space=sflag, size = 0x8, scoped, tag = 'scoped memory for tpu_custom_call.1']
    #allocation5 [shape = 'u8[4096]{0}', space=vmem, size = 0x1000, scoped, tag = 'input window, operand 1']
    #allocation6 [shape = 's32[2]{0}', space=sflag, size = 0x8, scoped, tag = 'scoped memory for tpu_custom_call.1']
    #allocation7 [shape = 'u8[4096]{0}', space=vmem, size = 0x1000, scoped, tag = 'input window, operand 2']
    #allocation8 [shape = 'u8[8192]{0}', space=vmem, size = 0x2000, scoped, tag = 'input window, operand 3, single buffered']
    #allocation9 [shape = 's32[1]{0}', space=sflag, size = 0x4, scoped, tag = 'scoped memory for tpu_custom_call.1']
    #allocation10 [shape = 'u8[8192]{0}', space=vmem, size = 0x2000, scoped, tag = 'input window, operand 4, single buffered']
    #allocation11 [shape = 'u8[8192]{0}', space=vmem, size = 0x2000, scoped, tag = 'input window, operand 5, single buffered']
    #allocation12 [shape = 's32[1]{0}', space=sflag, size = 0x4, scoped, tag = 'scoped memory for tpu_custom_call.1']
    #allocation13 [shape = 'u8[4096]{0}', space=vmem, size = 0x1000, scoped, tag = 'output window, operand 0']
    #allocation14 [shape = 'u8[4096]{0}', space=vmem, size = 0x1000, scoped, tag = 'output window, operand 1']
    #allocation15 [shape = 's32[2]{0}', space=sflag, size = 0x8, scoped, tag = 'scoped memory for tpu_custom_call.1']
    #allocation16 [shape = 'u8[4096]{0}', space=vmem, size = 0x1000, scoped, tag = 'output window, operand 2']
    %14 = vsyncpa [#allocation3], 0
    %s15 = scalar_lea.sflag [#allocation3], 1
    %16 = vsyncpa %s15, 0
    %17 = vsyncpa [#allocation6], 0
    %s18 = scalar_lea.sflag [#allocation6], 1
    %19 = vsyncpa %s18, 0
    %20 = vsyncpa [#allocation9], 0
    %21 = vsyncpa [#allocation12], 0
    %22 = vsyncpa [#allocation4], 0
    %s23 = scalar_lea.sflag [#allocation4], 1
    %24 = vsyncpa %s23, 0
    %25 = vsyncpa [#allocation15], 0
    %s26 = scalar_lea.sflag [#allocation15], 1
    %27 = vsyncpa %s26, 0
    loop: start=0, step=1, limit=4
    $region2: #{tpu_custom_call.1} parent=1 // loop_pre_header
      _
    $region3: #{tpu_custom_call.1} parent=1 // loop_header
      %s29 = sphi 0, %s33
      %p30 = scmp.ge.s32.totalorder %s29, 4
      %s36 = sphi 0, %s48
      %s37 = sphi 0, %s44
      %s38 = sphi 0, %s36
      %s39 = sphi 0, %s37
      %s40 = sphi 0, %s38
      %s41 = sphi 0, %s39
      %s53 = sphi 0, %s55
      %s56 = sphi 0, %s53
      %s57 = sphi 0, %s56
      %s73 = sphi 0, %s57
      %s81 = sphi 0, %s83
      %s84 = sphi 0, %s81
      %s85 = sphi 0, %s84
      %s101 = sphi 0, %s85
      %s109 = sphi 0, %s111
      %s112 = sphi 0, %s109
      %s113 = sphi 0, %s112
      %s129 = sphi 0, %s113
      %s133 = sphi 0, %s133
      %s135 = sphi 0, %s133
      %s136 = sphi 0, %s135
      %s150 = sphi 0, %s136
      %s154 = sphi 0, %s154
      %s156 = sphi 0, %s154
      %s157 = sphi 0, %s156
      %s171 = sphi 0, %s157
      %s175 = sphi 0, %s175
      %s177 = sphi 0, %s175
      %s178 = sphi 0, %s177
      %s192 = sphi 0, %s178
      %s200 = sphi 0, %s202
      %s203 = sphi 0, %s200
      %s204 = sphi 0, %s203
      %s220 = sphi 0, %s204
      %s228 = sphi 0, %s230
      %s231 = sphi 0, %s228
      %s232 = sphi 0, %s231
      %s248 = sphi 0, %s232
      %s256 = sphi 0, %s258
      %s259 = sphi 0, %s256
      %s260 = sphi 0, %s259
      %s276 = sphi 0, %s260
    $region4: #{tpu_custom_call.1} parent=1 // loop_header_branch
      %32 = sbr.rel (%p30) target = $region8
    $region5: #{tpu_custom_call.1} parent=1 // loop_body
      %s34 = ssub.s32 %s29, 1
      %s35 = ssub.s32 %s29, 2
      %s42 = sadd.s32 1, %s37
      %p43 = scmp.ge.s32.totalorder %s42, 1
      %s44 = scalar_select %p43, 0, %s42
      %s45 = sadd.s32 1, %s36
      %s46 = scalar_select %p43, %s45, %s36
      %p47 = scmp.ge.s32.totalorder %s46, 2
      %s48 = scalar_select %p47, 0, %s46
      %s49 = ssub.s32 %s36, %s48
      %s50 = ssub.s32 %s37, %s44
      %s51 = sor.u32 %s49, %s50
      %p52 = scmp.eq.s32.totalorder %s51, 0
      %s54 = sadd.s32 %s53, 1
      %s55 = scalar_select %p52, %s53, %s54
      %p58 = pneg %p52
      %p59 = scmp.eq.s32.totalorder %s29, 1
      %p60 = por %p58, %p59
      %p61 = scmp.ne.s32.totalorder %s53, %s56
      %p62 = scmp.eq.s32.totalorder %s29, 0
      %p63 = por %p61, %p62
      %p64 = scmp.ne.s32.totalorder %s53, %s56
      %p65 = scmp.eq.s32.totalorder %s34, 1
      %p66 = por %p64, %p65
      %p67 = scmp.ne.s32.totalorder %s56, %s57
      %p68 = scmp.eq.s32.totalorder %s34, 0
      %p69 = por %p67, %p68
      %p70 = scmp.ne.s32.totalorder %s56, %s57
      %p71 = scmp.eq.s32.totalorder %s35, 1
      %p72 = por %p70, %p71
      %p74 = scmp.ne.s32.totalorder %s57, %s73
      %p75 = scmp.eq.s32.totalorder %s35, 0
      %p76 = por %p74, %p75
      %s77 = ssub.s32 %s36, %s48
      %s78 = ssub.s32 %s37, %s44
      %s79 = sor.u32 %s77, %s78
      %p80 = scmp.eq.s32.totalorder %s79, 0
      %s82 = sadd.s32 %s81, 1
      %s83 = scalar_select %p80, %s81, %s82
      %p86 = pneg %p80
      %p87 = scmp.eq.s32.totalorder %s29, 1
      %p88 = por %p86, %p87
      %p89 = scmp.ne.s32.totalorder %s81, %s84
      %p90 = scmp.eq.s32.totalorder %s29, 0
      %p91 = por %p89, %p90
      %p92 = scmp.ne.s32.totalorder %s81, %s84
      %p93 = scmp.eq.s32.totalorder %s34, 1
      %p94 = por %p92, %p93
      %p95 = scmp.ne.s32.totalorder %s84, %s85
      %p96 = scmp.eq.s32.totalorder %s34, 0
      %p97 = por %p95, %p96
      %p98 = scmp.ne.s32.totalorder %s84, %s85
      %p99 = scmp.eq.s32.totalorder %s35, 1
      %p100 = por %p98, %p99
      %p102 = scmp.ne.s32.totalorder %s85, %s101
      %p103 = scmp.eq.s32.totalorder %s35, 0
      %p104 = por %p102, %p103
      %s105 = ssub.s32 %s36, %s48
      %s106 = ssub.s32 %s37, %s44
      %s107 = sor.u32 %s105, %s106
      %p108 = scmp.eq.s32.totalorder %s107, 0
      %s110 = sadd.s32 %s109, 1
      %s111 = scalar_select %p108, %s109, %s110
      %p114 = pneg %p108
      %p115 = scmp.eq.s32.totalorder %s29, 1
      %p116 = por %p114, %p115
      %p117 = scmp.ne.s32.totalorder %s109, %s112
      %p118 = scmp.eq.s32.totalorder %s29, 0
      %p119 = por %p117, %p118
      %p120 = scmp.ne.s32.totalorder %s109, %s112
      %p121 = scmp.eq.s32.totalorder %s34, 1
      %p122 = por %p120, %p121
      %p123 = scmp.ne.s32.totalorder %s112, %s113
      %p124 = scmp.eq.s32.totalorder %s34, 0
      %p125 = por %p123, %p124
      %p126 = scmp.ne.s32.totalorder %s112, %s113
      %p127 = scmp.eq.s32.totalorder %s35, 1
      %p128 = por %p126, %p127
      %p130 = scmp.ne.s32.totalorder %s113, %s129
      %p131 = scmp.eq.s32.totalorder %s35, 0
      %p132 = por %p130, %p131
      %s134 = sadd.s32 %s133, 1
      %p137 = scmp.eq.s32.totalorder %s29, 1
      %p138 = scmp.ne.s32.totalorder %s133, %s135
      %p139 = scmp.eq.s32.totalorder %s29, 0
      %p140 = por %p138, %p139
      %p141 = scmp.ne.s32.totalorder %s133, %s135
      %p142 = scmp.eq.s32.totalorder %s34, 1
      %p143 = por %p141, %p142
      %p144 = scmp.ne.s32.totalorder %s135, %s136
      %p145 = scmp.eq.s32.totalorder %s34, 0
      %p146 = por %p144, %p145
      %p147 = scmp.ne.s32.totalorder %s135, %s136
      %p148 = scmp.eq.s32.totalorder %s35, 1
      %p149 = por %p147, %p148
      %p151 = scmp.ne.s32.totalorder %s136, %s150
      %p152 = scmp.eq.s32.totalorder %s35, 0
      %p153 = por %p151, %p152
      %s155 = sadd.s32 %s154, 1
      %p158 = scmp.eq.s32.totalorder %s29, 1
      %p159 = scmp.ne.s32.totalorder %s154, %s156
      %p160 = scmp.eq.s32.totalorder %s29, 0
      %p161 = por %p159, %p160
      %p162 = scmp.ne.s32.totalorder %s154, %s156
      %p163 = scmp.eq.s32.totalorder %s34, 1
      %p164 = por %p162, %p163
      %p165 = scmp.ne.s32.totalorder %s156, %s157
      %p166 = scmp.eq.s32.totalorder %s34, 0
      %p167 = por %p165, %p166
      %p168 = scmp.ne.s32.totalorder %s156, %s157
      %p169 = scmp.eq.s32.totalorder %s35, 1
      %p170 = por %p168, %p169
      %p172 = scmp.ne.s32.totalorder %s157, %s171
      %p173 = scmp.eq.s32.totalorder %s35, 0
      %p174 = por %p172, %p173
      %s176 = sadd.s32 %s175, 1
      %p179 = scmp.eq.s32.totalorder %s29, 1
      %p180 = scmp.ne.s32.totalorder %s175, %s177
      %p181 = scmp.eq.s32.totalorder %s29, 0
      %p182 = por %p180, %p181
      %p183 = scmp.ne.s32.totalorder %s175, %s177
      %p184 = scmp.eq.s32.totalorder %s34, 1
      %p185 = por %p183, %p184
      %p186 = scmp.ne.s32.totalorder %s177, %s178
      %p187 = scmp.eq.s32.totalorder %s34, 0
      %p188 = por %p186, %p187
      %p189 = scmp.ne.s32.totalorder %s177, %s178
      %p190 = scmp.eq.s32.totalorder %s35, 1
      %p191 = por %p189, %p190
      %p193 = scmp.ne.s32.totalorder %s178, %s192
      %p194 = scmp.eq.s32.totalorder %s35, 0
      %p195 = por %p193, %p194
      %s196 = ssub.s32 %s36, %s48
      %s197 = ssub.s32 %s37, %s44
      %s198 = sor.u32 %s196, %s197
      %p199 = scmp.eq.s32.totalorder %s198, 0
      %s201 = sadd.s32 %s200, 1
      %s202 = scalar_select %p199, %s200, %s201
      %p205 = pneg %p199
      %p206 = scmp.eq.s32.totalorder %s29, 1
      %p207 = por %p205, %p206
      %p208 = scmp.ne.s32.totalorder %s200, %s203
      %p209 = scmp.eq.s32.totalorder %s29, 0
      %p210 = por %p208, %p209
      %p211 = scmp.ne.s32.totalorder %s200, %s203
      %p212 = scmp.eq.s32.totalorder %s34, 1
      %p213 = por %p211, %p212
      %p214 = scmp.ne.s32.totalorder %s203, %s204
      %p215 = scmp.eq.s32.totalorder %s34, 0
      %p216 = por %p214, %p215
      %p217 = scmp.ne.s32.totalorder %s203, %s204
      %p218 = scmp.eq.s32.totalorder %s35, 1
      %p219 = por %p217, %p218
      %p221 = scmp.ne.s32.totalorder %s204, %s220
      %p222 = scmp.eq.s32.totalorder %s35, 0
      %p223 = por %p221, %p222
      %s224 = ssub.s32 %s36, %s48
      %s225 = ssub.s32 %s37, %s44
      %s226 = sor.u32 %s224, %s225
      %p227 = scmp.eq.s32.totalorder %s226, 0
      %s229 = sadd.s32 %s228, 1
      %s230 = scalar_select %p227, %s228, %s229
      %p233 = pneg %p227
      %p234 = scmp.eq.s32.totalorder %s29, 1
      %p235 = por %p233, %p234
      %p236 = scmp.ne.s32.totalorder %s228, %s231
      %p237 = scmp.eq.s32.totalorder %s29, 0
      %p238 = por %p236, %p237
      %p239 = scmp.ne.s32.totalorder %s228, %s231
      %p240 = scmp.eq.s32.totalorder %s34, 1
      %p241 = por %p239, %p240
      %p242 = scmp.ne.s32.totalorder %s231, %s232
      %p243 = scmp.eq.s32.totalorder %s34, 0
      %p244 = por %p242, %p243
      %p245 = scmp.ne.s32.totalorder %s231, %s232
      %p246 = scmp.eq.s32.totalorder %s35, 1
      %p247 = por %p245, %p246
      %p249 = scmp.ne.s32.totalorder %s232, %s248
      %p250 = scmp.eq.s32.totalorder %s35, 0
      %p251 = por %p249, %p250
      %s252 = ssub.s32 %s36, %s48
      %s253 = ssub.s32 %s37, %s44
      %s254 = sor.u32 %s252, %s253
      %p255 = scmp.eq.s32.totalorder %s254, 0
      %s257 = sadd.s32 %s256, 1
      %s258 = scalar_select %p255, %s256, %s257
      %p261 = pneg %p255
      %p262 = scmp.eq.s32.totalorder %s29, 1
      %p263 = por %p261, %p262
      %p264 = scmp.ne.s32.totalorder %s256, %s259
      %p265 = scmp.eq.s32.totalorder %s29, 0
      %p266 = por %p264, %p265
      %p267 = scmp.ne.s32.totalorder %s256, %s259
      %p268 = scmp.eq.s32.totalorder %s34, 1
      %p269 = por %p267, %p268
      %p270 = scmp.ne.s32.totalorder %s259, %s260
      %p271 = scmp.eq.s32.totalorder %s34, 0
      %p272 = por %p270, %p271
      %p273 = scmp.ne.s32.totalorder %s259, %s260
      %p274 = scmp.eq.s32.totalorder %s35, 1
      %p275 = por %p273, %p274
      %p277 = scmp.ne.s32.totalorder %s260, %s276
      %p278 = scmp.eq.s32.totalorder %s35, 0
      %p279 = por %p277, %p278
      %p280 = scmp.le.s32.totalorder 1, %s29
      %p281 = scmp.lt.s32.totalorder %s29, 3
      %p282 = pnand %p280, %p281
      %p283 = pneg %p282
      // Predicated region
      $region9: #{tpu_custom_call.1} parent=5 // pred_check
        _
      $region10: #{tpu_custom_call.1} parent=5 // pred_check_branch
        %285 = sbr.rel (%p282) target = $region12
      $region11: #{tpu_custom_call.1} parent=5 // pred_region
        %s286 = ssub.s32 %s29, 1
        // Predicated region
        $region13: #{tpu_custom_call.1} parent=11 // pred_check
          %p287 = pneg %p146
        $region14: #{tpu_custom_call.1} parent=11 // pred_check_branch
          %289 = sbr.rel (%p287) target = $region16
        $region15: #{tpu_custom_call.1} parent=11 // pred_region
          %s291 = ssub.s32 256, 256
          %292 = vsyncadd [#allocation9], %s291
          %s293 = sshll.u32 [#allocation8], 4
          %s294 = int_to_ptr.vmem [resolvable:$true] %s293
          %299 = dma.hbm_to_vmem [thread:$0]  %s3, 256, %s294, [#allocation9], 64, 64, 4
        $region16: #{tpu_custom_call.1} parent=11 // pred_fallthru
          _
        // Predicated region
        $region17: #{tpu_custom_call.1} parent=11 // pred_check
          %p300 = pneg %p167
        $region18: #{tpu_custom_call.1} parent=11 // pred_check_branch
          %302 = sbr.rel (%p300) target = $region20
        $region19: #{tpu_custom_call.1} parent=11 // pred_region
          %s304 = ssub.s32 256, 256
          %305 = vsyncadd [#allocation9], %s304
          %s306 = sshll.u32 [#allocation10], 4
          %s307 = int_to_ptr.vmem [resolvable:$true] %s306
          %312 = dma.hbm_to_vmem [thread:$0]  %s4, 256, %s307, [#allocation9], 64, 64, 4
        $region20: #{tpu_custom_call.1} parent=11 // pred_fallthru
          _
        // Predicated region
        $region21: #{tpu_custom_call.1} parent=11 // pred_check
          %p313 = pneg %p188
        $region22: #{tpu_custom_call.1} parent=11 // pred_check_branch
          %315 = sbr.rel (%p313) target = $region24
        $region23: #{tpu_custom_call.1} parent=11 // pred_region
          %s317 = ssub.s32 256, 256
          %318 = vsyncadd [#allocation12], %s317
          %s319 = sshll.u32 [#allocation11], 4
          %s320 = int_to_ptr.vmem [resolvable:$true] %s319
          %325 = dma.hbm_to_vmem [thread:$0]  %s5, 256, %s320, [#allocation12], 64, 64, 4
        $region24: #{tpu_custom_call.1} parent=11 // pred_fallthru
          _
      $region12: #{tpu_custom_call.1} parent=5 // pred_fallthru
        _
      %p326 = scmp.lt.s32.totalorder %s29, 2
      // Predicated region
      $region25: #{tpu_custom_call.1} parent=5 // pred_check
        %p327 = pneg %p326
      $region26: #{tpu_custom_call.1} parent=5 // pred_check_branch
        %329 = sbr.rel (%p327) target = $region28
      $region27: #{tpu_custom_call.1} parent=5 // pred_region
        // Predicated region
        $region29: #{tpu_custom_call.1} parent=27 // pred_check
          %p330 = pneg %p63
        $region30: #{tpu_custom_call.1} parent=27 // pred_check_branch
          %332 = sbr.rel (%p330) target = $region32
        $region31: #{tpu_custom_call.1} parent=27 // pred_region
          %s333 = sand.u32 %s53, 1
          %s334 = scalar_lea.sflag [#allocation3], %s333
          %s335 = sand.u32 %s53, 1
          %s336 = smul.addr %s335, 4
          %s337 = scalar_lea.vmem [#allocation2], %s336
          %s339 = ssub.s32 64, 64
          %340 = vsyncadd %s334, %s339
          %s341 = sadd.s32 %s37, %s36
          %s342 = smul.addr %s341, 64
          %s343 = scalar_lea.hbm %s0, %s342
          %s345 = sshll.u32 %s337, 4
          %s346 = int_to_ptr.vmem [resolvable:$true] %s345
          %348 = dma.hbm_to_vmem [thread:$0]  %s343, 64, %s346, %s334
        $region32: #{tpu_custom_call.1} parent=27 // pred_fallthru
          _
        // Predicated region
        $region33: #{tpu_custom_call.1} parent=27 // pred_check
          %p349 = pneg %p91
        $region34: #{tpu_custom_call.1} parent=27 // pred_check_branch
          %351 = sbr.rel (%p349) target = $region36
        $region35: #{tpu_custom_call.1} parent=27 // pred_region
          %s352 = sand.u32 %s29, 1
          %s353 = scalar_lea.sflag [#allocation6], %s352
          %s354 = sand.u32 %s81, 1
          %s355 = smul.addr %s354, 4
          %s356 = scalar_lea.vmem [#allocation5], %s355
          %s358 = ssub.s32 64, 64
          %359 = vsyncadd %s353, %s358
          %s360 = sadd.s32 %s37, %s36
          %s361 = smul.addr %s360, 64
          %s362 = scalar_lea.hbm %s1, %s361
          %s364 = sshll.u32 %s356, 4
          %s365 = int_to_ptr.vmem [resolvable:$true] %s364
          %367 = dma.hbm_to_vmem [thread:$0]  %s362, 64, %s365, %s353
        $region36: #{tpu_custom_call.1} parent=27 // pred_fallthru
          _
        // Predicated region
        $region37: #{tpu_custom_call.1} parent=27 // pred_check
          %p368 = pneg %p119
        $region38: #{tpu_custom_call.1} parent=27 // pred_check_branch
          %370 = sbr.rel (%p368) target = $region40
        $region39: #{tpu_custom_call.1} parent=27 // pred_region
          %s371 = sand.u32 %s29, 1
          %s372 = scalar_lea.sflag [#allocation6], %s371
          %s373 = sand.u32 %s109, 1
          %s374 = smul.addr %s373, 4
          %s375 = scalar_lea.vmem [#allocation7], %s374
          %s377 = ssub.s32 64, 64
          %378 = vsyncadd %s372, %s377
          %s379 = sadd.s32 %s37, %s36
          %s380 = smul.addr %s379, 64
          %s381 = scalar_lea.hbm %s2, %s380
          %s383 = sshll.u32 %s375, 4
          %s384 = int_to_ptr.vmem [resolvable:$true] %s383
          %386 = dma.hbm_to_vmem [thread:$0]  %s381, 64, %s384, %s372
        $region40: #{tpu_custom_call.1} parent=27 // pred_fallthru
          _
      $region28: #{tpu_custom_call.1} parent=5 // pred_fallthru
        _
      %p387 = scmp.le.s32.totalorder 1, %s29
      %p388 = scmp.lt.s32.totalorder %s29, 3
      %p389 = pnand %p387, %p388
      %p390 = pneg %p389
      // Predicated region
      $region41: #{tpu_custom_call.1} parent=5 // pred_check
        _
      $region42: #{tpu_custom_call.1} parent=5 // pred_check_branch
        %392 = sbr.rel (%p389) target = $region44
      $region43: #{tpu_custom_call.1} parent=5 // pred_region
        %s393 = ssub.s32 %s29, 1
        %s394 = sand.u32 %s56, 1
        %s395 = scalar_lea.sflag [#allocation3], %s394
        %s396 = sand.u32 %s56, 1
        %s397 = smul.addr %s396, 4
        %s398 = scalar_lea.vmem [#allocation2], %s397
        // Predicated region
        $region45: #{tpu_custom_call.1} parent=43 // pred_check
          %p399 = pneg %p69
        $region46: #{tpu_custom_call.1} parent=43 // pred_check_branch
          %401 = sbr.rel (%p399) target = $region48
        $region47: #{tpu_custom_call.1} parent=43 // pred_region
          %402 = dma.done %s395, 64
        $region48: #{tpu_custom_call.1} parent=43 // pred_fallthru
          _
        %s403 = sand.u32 %s34, 1
        %s404 = scalar_lea.sflag [#allocation6], %s403
        %s405 = sand.u32 %s84, 1
        %s406 = smul.addr %s405, 4
        %s407 = scalar_lea.vmem [#allocation5], %s406
        // Predicated region
        $region49: #{tpu_custom_call.1} parent=43 // pred_check
          %p408 = pneg %p97
        $region50: #{tpu_custom_call.1} parent=43 // pred_check_branch
          %410 = sbr.rel (%p408) target = $region52
        $region51: #{tpu_custom_call.1} parent=43 // pred_region
          %411 = dma.done %s404, 64
        $region52: #{tpu_custom_call.1} parent=43 // pred_fallthru
          _
        %s412 = sand.u32 %s34, 1
        %s413 = scalar_lea.sflag [#allocation6], %s412
        %s414 = sand.u32 %s112, 1
        %s415 = smul.addr %s414, 4
        %s416 = scalar_lea.vmem [#allocation7], %s415
        // Predicated region
        $region53: #{tpu_custom_call.1} parent=43 // pred_check
          %p417 = pneg %p125
        $region54: #{tpu_custom_call.1} parent=43 // pred_check_branch
          %419 = sbr.rel (%p417) target = $region56
        $region55: #{tpu_custom_call.1} parent=43 // pred_region
          %420 = dma.done %s413, 64
        $region56: #{tpu_custom_call.1} parent=43 // pred_fallthru
          _
        // Predicated region
        $region57: #{tpu_custom_call.1} parent=43 // pred_check
          %p421 = pneg %p146
        $region58: #{tpu_custom_call.1} parent=43 // pred_check_branch
          %423 = sbr.rel (%p421) target = $region60
        $region59: #{tpu_custom_call.1} parent=43 // pred_region
          %424 = dma.done [#allocation9], 256
        $region60: #{tpu_custom_call.1} parent=43 // pred_fallthru
          _
        // Predicated region
        $region61: #{tpu_custom_call.1} parent=43 // pred_check
          %p425 = pneg %p167
        $region62: #{tpu_custom_call.1} parent=43 // pred_check_branch
          %427 = sbr.rel (%p425) target = $region64
        $region63: #{tpu_custom_call.1} parent=43 // pred_region
          %428 = dma.done [#allocation9], 256
        $region64: #{tpu_custom_call.1} parent=43 // pred_fallthru
          _
        // Predicated region
        $region65: #{tpu_custom_call.1} parent=43 // pred_check
          %p429 = pneg %p188
        $region66: #{tpu_custom_call.1} parent=43 // pred_check_branch
          %431 = sbr.rel (%p429) target = $region68
        $region67: #{tpu_custom_call.1} parent=43 // pred_region
          %432 = dma.done [#allocation12], 256
        $region68: #{tpu_custom_call.1} parent=43 // pred_fallthru
          _
        %s433 = sand.u32 %s56, 1
        %s434 = scalar_lea.sflag [#allocation3], %s433
        %s435 = sand.u32 %s56, 1
        %s436 = smul.addr %s435, 4
        %s437 = scalar_lea.vmem [#allocation2], %s436
        %p438 = pneg %p69
        %p439 = pneg %p66
        %s440 = sand.u32 %s34, 1
        %s441 = scalar_lea.sflag [#allocation6], %s440
        %s442 = sand.u32 %s84, 1
        %s443 = smul.addr %s442, 4
        %s444 = scalar_lea.vmem [#allocation5], %s443
        %p445 = pneg %p97
        %p446 = pneg %p94
        %s447 = sand.u32 %s34, 1
        %s448 = scalar_lea.sflag [#allocation6], %s447
        %s449 = sand.u32 %s112, 1
        %s450 = smul.addr %s449, 4
        %s451 = scalar_lea.vmem [#allocation7], %s450
        %p452 = pneg %p125
        %p453 = pneg %p122
        %p454 = pneg %p146
        %p455 = pneg %p143
        %p456 = pneg %p167
        %p457 = pneg %p164
        %p458 = pneg %p188
        %p459 = pneg %p185
        %p460 = pneg %p216
        %p461 = pneg %p213
        %s462 = sand.u32 %s203, 1
        %s463 = scalar_lea.sflag [#allocation4], %s462
        %s464 = sand.u32 %s203, 1
        %s465 = smul.addr %s464, 4
        %s466 = scalar_lea.vmem [#allocation13], %s465
        %p467 = pneg %p244
        %p468 = pneg %p241
        %s469 = sand.u32 %s34, 1
        %s470 = scalar_lea.sflag [#allocation15], %s469
        %s471 = sand.u32 %s231, 1
        %s472 = smul.addr %s471, 4
        %s473 = scalar_lea.vmem [#allocation14], %s472
        %p474 = pneg %p272
        %p475 = pneg %p269
        %s476 = sand.u32 %s34, 1
        %s477 = scalar_lea.sflag [#allocation15], %s476
        %s478 = sand.u32 %s259, 1
        %s479 = smul.addr %s478, 4
        %s480 = scalar_lea.vmem [#allocation16], %s479
        %v482 = vld [vmem:[%s398] sm:$0xf]
        %v483 = vld [vmem:[#allocation8] sm:$0xf]
        %v484 = vld [vmem:[#allocation8 + $0x4] sm:$0xf]
        %v485 = vld [vmem:[#allocation8 + $0x8] sm:$0xf]
        %v486 = vld [vmem:[#allocation8 + $0xc] sm:$0xf]
        %v491 = vunpack.c.l.b16 %v483
        %v492 = vunpack.c.l.b16 %v484
        %v493 = vunpack.c.l.b16 %v485
        %v494 = vunpack.c.l.b16 %v486
        %v495 = vpack.c.b16 %v492, %v491
        %v496 = vpack.c.b16 %v494, %v493
        %vm499 = vcmask 261120
        %v501 = vsel %vm499, %v482, 0
        %503 = vmatprep.subr.bf16.mxu0 0
        %504 = vmatpush1.bf16.msra.mxu0 0
        %505 = vmatprep.subr.bf16.mxu0 0
        %506 = vmatpush1.bf16.msra.mxu0 0
        %507 = vmatprep.subr.bf16.mxu0 0
        %508 = vmatpush1.bf16.msra.mxu0 0
        %509 = vmatprep.subr.bf16.mxu0 0
        %510 = vmatpush1.bf16.msra.mxu0 0
        %511 = vmatprep.subr.bf16.mxu0 0
        %512 = vmatpush1.bf16.msra.mxu0 0
        %513 = vmatprep.subr.bf16.mxu0 0
        %514 = vmatpush1.bf16.msra.mxu0 0
        %515 = vmatprep.subr.bf16.mxu0 0
        %516 = vmatpush1.bf16.msra.mxu0 %v496
        %517 = vmatprep.subr.bf16.mxu0 0
        %518 = vmatpush1.bf16.msra.mxu0 %v495
        %519 = vmatprep.subr.bf16.mxu0 0
        %520 = vmatpush2.bf16.msra.mxu0 0
        %521 = vmatprep.subr.bf16.mxu0 0
        %522 = vmatpush2.bf16.msra.mxu0 0
        %523 = vmatprep.subr.bf16.mxu0 0
        %524 = vmatpush2.bf16.msra.mxu0 0
        %525 = vmatprep.subr.bf16.mxu0 0
        %526 = vmatpush2.bf16.msra.mxu0 0
        %527 = vmatprep.subr.bf16.mxu0 0
        %528 = vmatpush2.bf16.msra.mxu0 0
        %529 = vmatprep.subr.bf16.mxu0 0
        %530 = vmatpush2.bf16.msra.mxu0 0
        %531 = vmatprep.subr.bf16.mxu0 0
        %532 = vmatpush2.bf16.msra.mxu0 0
        %533 = vmatprep.subr.bf16.mxu0 0
        %534 = vmatpush2.bf16.msra.mxu0 0
        %535 = vmatprep.mubr.bf16.mxu0 0
        %536 = vmatmul.mubr.bf16.gmra.mxu0 %v501
        %v537 = vpop.f32.mrf.mxu0
        %v538 = vadd.f32 0.0, %v537
        %v539 = vpop.f32.mrf.mxu0
        %v540 = vpop.f32.mrf.mxu0
        %v541 = vpop.f32.mrf.mxu0
        %542 = vdwg.mxu0
        %v543 = vpack.c.bf16 %v538, %v538
        %vm544 = vcmask 257024
        %545 = vst.msk [vmem:[%s466] sm:$0xf] %vm544, %v543
        %v546 = vld [vmem:[%s407] sm:$0xf]
        %v547 = vld [vmem:[#allocation10] sm:$0xf]
        %v548 = vld [vmem:[#allocation10 + $0x4] sm:$0xf]
        %v549 = vld [vmem:[#allocation10 + $0x8] sm:$0xf]
        %v550 = vld [vmem:[#allocation10 + $0xc] sm:$0xf]
        %v555 = vunpack.c.l.b16 %v547
        %v556 = vunpack.c.l.b16 %v548
        %v557 = vunpack.c.l.b16 %v549
        %v558 = vunpack.c.l.b16 %v550
        %v559 = vpack.c.b16 %v556, %v555
        %v560 = vpack.c.b16 %v558, %v557
        %v564 = vsel %vm499, %v546, 0
        %566 = vmatprep.subr.bf16.mxu0 0
        %567 = vmatpush1.bf16.msra.mxu0 0
        %568 = vmatprep.subr.bf16.mxu0 0
        %569 = vmatpush1.bf16.msra.mxu0 0
        %570 = vmatprep.subr.bf16.mxu0 0
        %571 = vmatpush1.bf16.msra.mxu0 0
        %572 = vmatprep.subr.bf16.mxu0 0
        %573 = vmatpush1.bf16.msra.mxu0 0
        %574 = vmatprep.subr.bf16.mxu0 0
        %575 = vmatpush1.bf16.msra.mxu0 0
        %576 = vmatprep.subr.bf16.mxu0 0
        %577 = vmatpush1.bf16.msra.mxu0 0
        %578 = vmatprep.subr.bf16.mxu0 0
        %579 = vmatpush1.bf16.msra.mxu0 %v560
        %580 = vmatprep.subr.bf16.mxu0 0
        %581 = vmatpush1.bf16.msra.mxu0 %v559
        %582 = vmatprep.subr.bf16.mxu0 0
        %583 = vmatpush2.bf16.msra.mxu0 0
        %584 = vmatprep.subr.bf16.mxu0 0
        %585 = vmatpush2.bf16.msra.mxu0 0
        %586 = vmatprep.subr.bf16.mxu0 0
        %587 = vmatpush2.bf16.msra.mxu0 0
        %588 = vmatprep.subr.bf16.mxu0 0
        %589 = vmatpush2.bf16.msra.mxu0 0
        %590 = vmatprep.subr.bf16.mxu0 0
        %591 = vmatpush2.bf16.msra.mxu0 0
        %592 = vmatprep.subr.bf16.mxu0 0
        %593 = vmatpush2.bf16.msra.mxu0 0
        %594 = vmatprep.subr.bf16.mxu0 0
        %595 = vmatpush2.bf16.msra.mxu0 0
        %596 = vmatprep.subr.bf16.mxu0 0
        %597 = vmatpush2.bf16.msra.mxu0 0
        %598 = vmatprep.mubr.bf16.mxu0 0
        %599 = vmatmul.mubr.bf16.gmra.mxu0 %v564
        %v600 = vpop.f32.mrf.mxu0
        %v601 = vadd.f32 0.0, %v600
        %v602 = vpop.f32.mrf.mxu0
        %v603 = vpop.f32.mrf.mxu0
        %v604 = vpop.f32.mrf.mxu0
        %605 = vdwg.mxu0
        %v606 = vpack.c.bf16 %v601, %v601
        %607 = vst.msk [vmem:[%s473] sm:$0xf] %vm544, %v606
        %v608 = vld [vmem:[%s416] sm:$0xf]
        %v609 = vld [vmem:[#allocation11] sm:$0xf]
        %v610 = vld [vmem:[#allocation11 + $0x4] sm:$0xf]
        %v611 = vld [vmem:[#allocation11 + $0x8] sm:$0xf]
        %v612 = vld [vmem:[#allocation11 + $0xc] sm:$0xf]
        %v617 = vunpack.c.l.b16 %v609
        %v618 = vunpack.c.l.b16 %v610
        %v619 = vunpack.c.l.b16 %v611
        %v620 = vunpack.c.l.b16 %v612
        %v621 = vpack.c.b16 %v618, %v617
        %v622 = vpack.c.b16 %v620, %v619
        %v626 = vsel %vm499, %v608, 0
        %628 = vmatprep.subr.bf16.mxu0 0
        %629 = vmatpush1.bf16.msra.mxu0 0
        %630 = vmatprep.subr.bf16.mxu0 0
        %631 = vmatpush1.bf16.msra.mxu0 0
        %632 = vmatprep.subr.bf16.mxu0 0
        %633 = vmatpush1.bf16.msra.mxu0 0
        %634 = vmatprep.subr.bf16.mxu0 0
        %635 = vmatpush1.bf16.msra.mxu0 0
        %636 = vmatprep.subr.bf16.mxu0 0
        %637 = vmatpush1.bf16.msra.mxu0 0
        %638 = vmatprep.subr.bf16.mxu0 0
        %639 = vmatpush1.bf16.msra.mxu0 0
        %640 = vmatprep.subr.bf16.mxu0 0
        %641 = vmatpush1.bf16.msra.mxu0 %v622
        %642 = vmatprep.subr.bf16.mxu0 0
        %643 = vmatpush1.bf16.msra.mxu0 %v621
        %644 = vmatprep.subr.bf16.mxu0 0
        %645 = vmatpush2.bf16.msra.mxu0 0
        %646 = vmatprep.subr.bf16.mxu0 0
        %647 = vmatpush2.bf16.msra.mxu0 0
        %648 = vmatprep.subr.bf16.mxu0 0
        %649 = vmatpush2.bf16.msra.mxu0 0
        %650 = vmatprep.subr.bf16.mxu0 0
        %651 = vmatpush2.bf16.msra.mxu0 0
        %652 = vmatprep.subr.bf16.mxu0 0
        %653 = vmatpush2.bf16.msra.mxu0 0
        %654 = vmatprep.subr.bf16.mxu0 0
        %655 = vmatpush2.bf16.msra.mxu0 0
        %656 = vmatprep.subr.bf16.mxu0 0
        %657 = vmatpush2.bf16.msra.mxu0 0
        %658 = vmatprep.subr.bf16.mxu0 0
        %659 = vmatpush2.bf16.msra.mxu0 0
        %660 = vmatprep.mubr.bf16.mxu0 0
        %661 = vmatmul.mubr.bf16.gmra.mxu0 %v626
        %v662 = vpop.f32.mrf.mxu0
        %v663 = vadd.f32 0.0, %v662
        %v664 = vpop.f32.mrf.mxu0
        %v665 = vpop.f32.mrf.mxu0
        %v666 = vpop.f32.mrf.mxu0
        %667 = vdwg.mxu0
        %v668 = vpack.c.bf16 %v663, %v663
        %669 = vst.msk [vmem:[%s480] sm:$0xf] %vm544, %v668
        %s670 = sand.u32 %s203, 1
        %s671 = scalar_lea.sflag [#allocation4], %s670
        %s672 = sand.u32 %s203, 1
        %s673 = smul.addr %s672, 4
        %s674 = scalar_lea.vmem [#allocation13], %s673
        %s675 = sand.u32 %s34, 1
        %s676 = scalar_lea.sflag [#allocation15], %s675
        %s677 = sand.u32 %s231, 1
        %s678 = smul.addr %s677, 4
        %s679 = scalar_lea.vmem [#allocation14], %s678
        %s680 = sand.u32 %s34, 1
        %s681 = scalar_lea.sflag [#allocation15], %s680
        %s682 = sand.u32 %s259, 1
        %s683 = smul.addr %s682, 4
        %s684 = scalar_lea.vmem [#allocation16], %s683
        // Predicated region
        $region69: #{tpu_custom_call.1} parent=43 // pred_check
          %p685 = pneg %p213
        $region70: #{tpu_custom_call.1} parent=43 // pred_check_branch
          %687 = sbr.rel (%p685) target = $region72
        $region71: #{tpu_custom_call.1} parent=43 // pred_region
          %s689 = ssub.s32 64, 64
          %690 = vsyncadd %s671, %s689
          %s691 = sadd.s32 %s39, %s38
          %s692 = smul.addr %s691, 64
          %s693 = scalar_lea.hbm %s6, %s692
          %s695 = sshll.u32 %s674, 4
          %s696 = int_to_ptr.vmem [resolvable:$true] %s695
          %698 = dma.vmem_to_hbm [thread:$0]  %s696, 64, %s693, %s671
        $region72: #{tpu_custom_call.1} parent=43 // pred_fallthru
          _
        // Predicated region
        $region73: #{tpu_custom_call.1} parent=43 // pred_check
          %p699 = pneg %p241
        $region74: #{tpu_custom_call.1} parent=43 // pred_check_branch
          %701 = sbr.rel (%p699) target = $region76
        $region75: #{tpu_custom_call.1} parent=43 // pred_region
          %s703 = ssub.s32 64, 64
          %704 = vsyncadd %s676, %s703
          %s705 = sadd.s32 %s39, %s38
          %s706 = smul.addr %s705, 64
          %s707 = scalar_lea.hbm %s7, %s706
          %s709 = sshll.u32 %s679, 4
          %s710 = int_to_ptr.vmem [resolvable:$true] %s709
          %712 = dma.vmem_to_hbm [thread:$0]  %s710, 64, %s707, %s676
        $region76: #{tpu_custom_call.1} parent=43 // pred_fallthru
          _
        // Predicated region
        $region77: #{tpu_custom_call.1} parent=43 // pred_check
          %p713 = pneg %p269
        $region78: #{tpu_custom_call.1} parent=43 // pred_check_branch
          %715 = sbr.rel (%p713) target = $region80
        $region79: #{tpu_custom_call.1} parent=43 // pred_region
          %s717 = ssub.s32 64, 64
          %718 = vsyncadd %s681, %s717
          %s719 = sadd.s32 %s39, %s38
          %s720 = smul.addr %s719, 64
          %s721 = scalar_lea.hbm %s8, %s720
          %s723 = sshll.u32 %s684, 4
          %s724 = int_to_ptr.vmem [resolvable:$true] %s723
          %726 = dma.vmem_to_hbm [thread:$0]  %s724, 64, %s721, %s681
        $region80: #{tpu_custom_call.1} parent=43 // pred_fallthru
          _
      $region44: #{tpu_custom_call.1} parent=5 // pred_fallthru
        _
      %p727 = scmp.le.s32.totalorder 2, %s29
      // Predicated region
      $region81: #{tpu_custom_call.1} parent=5 // pred_check
        %p728 = pneg %p727
      $region82: #{tpu_custom_call.1} parent=5 // pred_check_branch
        %730 = sbr.rel (%p728) target = $region84
      $region83: #{tpu_custom_call.1} parent=5 // pred_region
        %s731 = ssub.s32 %s29, 2
        // Predicated region
        $region85: #{tpu_custom_call.1} parent=83 // pred_check
          %p732 = pneg %p219
        $region86: #{tpu_custom_call.1} parent=83 // pred_check_branch
          %734 = sbr.rel (%p732) target = $region88
        $region87: #{tpu_custom_call.1} parent=83 // pred_region
          %s735 = sand.u32 %s204, 1
          %s736 = scalar_lea.sflag [#allocation4], %s735
          %s737 = sand.u32 %s204, 1
          %s738 = smul.addr %s737, 4
          %s739 = scalar_lea.vmem [#allocation13], %s738
          %740 = dma.done %s736, 64
        $region88: #{tpu_custom_call.1} parent=83 // pred_fallthru
          _
        // Predicated region
        $region89: #{tpu_custom_call.1} parent=83 // pred_check
          %p741 = pneg %p247
        $region90: #{tpu_custom_call.1} parent=83 // pred_check_branch
          %743 = sbr.rel (%p741) target = $region92
        $region91: #{tpu_custom_call.1} parent=83 // pred_region
          %s744 = sand.u32 %s35, 1
          %s745 = scalar_lea.sflag [#allocation15], %s744
          %s746 = sand.u32 %s232, 1
          %s747 = smul.addr %s746, 4
          %s748 = scalar_lea.vmem [#allocation14], %s747
          %749 = dma.done %s745, 64
        $region92: #{tpu_custom_call.1} parent=83 // pred_fallthru
          _
        // Predicated region
        $region93: #{tpu_custom_call.1} parent=83 // pred_check
          %p750 = pneg %p275
        $region94: #{tpu_custom_call.1} parent=83 // pred_check_branch
          %752 = sbr.rel (%p750) target = $region96
        $region95: #{tpu_custom_call.1} parent=83 // pred_region
          %s753 = sand.u32 %s35, 1
          %s754 = scalar_lea.sflag [#allocation15], %s753
          %s755 = sand.u32 %s260, 1
          %s756 = smul.addr %s755, 4
          %s757 = scalar_lea.vmem [#allocation16], %s756
          %758 = dma.done %s754, 64
        $region96: #{tpu_custom_call.1} parent=83 // pred_fallthru
          _
      $region84: #{tpu_custom_call.1} parent=5 // pred_fallthru
        _
    $region6: #{tpu_custom_call.1} parent=1 // loop_footer
      %s33 = sadd.s32 1, %s29
    $region7: #{tpu_custom_call.1} parent=1 // loop_footer_branch
      %28 = sbr.rel target = $region3
    $region8: #{tpu_custom_call.1} parent=1 // loop_exit
      _
    %759 = vsyncpa [#allocation3], 1
    %s760 = scalar_lea.sflag [#allocation3], 1
    %761 = vsyncpa %s760, 1
    %762 = vsyncpa [#allocation6], 1
    %s763 = scalar_lea.sflag [#allocation6], 1
    %764 = vsyncpa %s763, 1
    %765 = vsyncpa [#allocation9], 1
    %766 = vsyncpa [#allocation12], 1
    %767 = vsyncpa [#allocation4], 1
    %s768 = scalar_lea.sflag [#allocation4], 1
    %769 = vsyncpa %s768, 1
    %770 = vsyncpa [#allocation15], 1
    %s771 = scalar_lea.sflag [#allocation15], 1
    %772 = vsyncpa %s771, 1

</llo_original>
